<compile_context>
chip_gen: v6e
topology: v6e:2x2x1
jax: 0.10.0
libtpu: 0.0.40
codegen_flags: <defaults>
</compile_context>

<pallas_src>
import jax
import jax.numpy as jnp
from jax.experimental import pallas as pl
from jax.experimental.pallas import tpu as pltpu

_MiB = 1024 * 1024
_DMA_TARGET_BYTES = 512 * 1024  # aim for >= ~0.5 MiB per DMA on the copy path


def _cost(x):
    return pl.CostEstimate(
        flops=0,
        transcendentals=0,
        bytes_accessed=2 * int(x.size) * int(x.dtype.itemsize),
    )


def _vmem_capacity_bytes():
    """Physical VMEM of the current TPU generation (best effort)."""
    try:
        info = pltpu.get_tpu_info()
        for name in ("vmem_capacity_bytes", "vmem_size_bytes", "vmem_bytes"):
            v = getattr(info, name, None)
            if v:
                return int(v)
    except Exception:
        pass
    return 64 * _MiB  # conservative (v7x-sized) default


def _budgets():
    """(per-block byte budget, vmem_limit_bytes), generation aware."""
    cap = _vmem_capacity_bytes()
    if cap > 64 * _MiB:            # v5e / v6e: 128 MiB physical VMEM
        return 4 * _MiB, 64 * _MiB
    return 2 * _MiB, 48 * _MiB     # v7x: 64 MiB physical, leave headroom


# ----------------------------------------------------------------------------
# NCHW -> NHWC fast path
# ----------------------------------------------------------------------------
def _plan_nchw(B, C, H, W, itemsize, block_budget):
    """Pick (tile_h, g): H-tile and output row-group factor."""
    sublane = max(8, (8 * 4) // max(1, itemsize))  # 8 f32, 16 bf16, 32 int8
    lane = 128

    # Smallest divisor of H making one grouped output row (g*W*C) lane-dense.
    g = None
    for d in range(1, H + 1):
        if H % d == 0 and (d * W * C) % lane == 0:
            g = d
            break
    if g is None:
        g = 1  # fall back to (B, H, W*C) slab (last dim full -> still legal)

    def layout_ok(t):
        if H % t or t % g:
            return False
        if (t * W) % lane and t != H:            # input block last dim
            return False
        rows, full_rows = t // g, H // g         # output block 2nd-minor dim
        if rows % sublane and rows != full_rows:
            return False
        return True

    cands = [t for t in range(1, H + 1) if layout_ok(t)]   # t = H always valid
    fits = [t for t in cands if C * t * W * itemsize <= block_budget]
    pool = fits if fits else [min(cands)]
    if B == 1:
        multi = [t for t in pool if t < H]       # keep >= 2 steps for megacore
        if multi:
            return max(multi), g
    return max(pool), g


def _nchw_to_nhwc_pallas(x, block_budget, vmem_limit):
    """Optimized (0, 2, 3, 1) permutation: NCHW -> NHWC."""
    B, C, H, W = x.shape
    itemsize = int(x.dtype.itemsize)
    tile_h, g = _plan_nchw(B, C, H, W, itemsize, block_budget)
    n_h = H // tile_h
    n_rows = tile_h // g      # output-block rows per grid step
    row = g * W               # grouped row length (pre-C); row*C % 128 == 0

    # Free, contiguous reshapes outside the kernel: lane-dense slabs.
    x3 = x.reshape(B, C, H * W)
    out_slab = (B, H // g, g * W * C)

    def kernel(x_ref, o_ref):
        v = x_ref[...]                            # (C, tile_h*W)  wide vld
        v = v.reshape(C, n_rows, row)
        v = jnp.transpose(v, (1, 2, 0))           # (n_rows, row, C) XLU relayout
        o_ref[...] = v.reshape(n_rows, row * C)   # wide, unmasked vst

    out3 = pl.pallas_call(
        kernel,
        out_shape=jax.ShapeDtypeStruct(out_slab, x.dtype),
        grid_spec=pltpu.PrefetchScalarGridSpec(
            num_scalar_prefetch=0,
            grid=(B, n_h),
            in_specs=[
                pl.BlockSpec((pl.Squeezed(), C, tile_h * W),
                             lambda b, h: (b, 0, h)),
            ],
            out_specs=pl.BlockSpec((pl.Squeezed(), n_rows, row * C),
                                   lambda b, h: (b, h, 0)),
        ),
        compiler_params=pltpu.CompilerParams(
            dimension_semantics=("parallel", "parallel"),
            vmem_limit_bytes=vmem_limit,
        ),
        cost_estimate=_cost(x),
    )(x3)
    return out3.reshape(B, H, W, C)


# ----------------------------------------------------------------------------
# Leading-axes-only permutation: pure DMA copy
# ----------------------------------------------------------------------------
def _leading_permute_dma_pallas(x, perm, block_budget, vmem_limit):
    """Permutation fixing the last two axes: DMA copy, no in-kernel transpose."""
    ndim = x.ndim
    n_lead = ndim - 2
    out_shape = tuple(x.shape[p] for p in perm)
    tail = x.shape[-2:]
    tail_bytes = int(tail[0]) * int(tail[1]) * int(x.dtype.itemsize)

    # Fold the innermost output leading axis into the block so small tails do
    # not degenerate into per-descriptor-overhead-dominated tiny DMAs.
    fold_axis_out = n_lead - 1
    fold_axis_in = perm[fold_axis_out]
    S = out_shape[fold_axis_out]
    fold = (tail_bytes < _DMA_TARGET_BYTES
            and S > 1
            and S * tail_bytes <= block_budget)

    if fold:
        grid = tuple(out_shape[j] for j in range(n_lead - 1))
        in_block = [1] * n_lead + list(tail)
        in_block[fold_axis_in] = S
        out_block = [1] * (n_lead - 1) + [S] + list(tail)

        def in_idx(*g):
            idx = []
            for a in range(n_lead):
                pos = perm.index(a)
                idx.append(0 if pos == fold_axis_out else g[pos])
            return tuple(idx) + (0, 0)

        def out_idx(*g):
            return tuple(g) + (0, 0, 0)
    else:
        grid = tuple(out_shape[:n_lead])
        in_block = [1] * n_lead + list(tail)
        out_block = [1] * n_lead + list(tail)

        def in_idx(*g):
            return tuple(g[perm.index(a)] for a in range(n_lead)) + (0, 0)

        def out_idx(*g):
            return tuple(g) + (0, 0)

    def kernel(x_ref, o_ref):
        # Only singleton leading dims move; the reshape is a free regroup.
        o_ref[...] = x_ref[...].reshape(o_ref.shape)

    return pl.pallas_call(
        kernel,
        out_shape=jax.ShapeDtypeStruct(out_shape, x.dtype),
        grid_spec=pltpu.PrefetchScalarGridSpec(
            num_scalar_prefetch=0,
            grid=grid,
            in_specs=[pl.BlockSpec(tuple(in_block), in_idx)],
            out_specs=pl.BlockSpec(tuple(out_block), out_idx),
        ),
        compiler_params=pltpu.CompilerParams(
            dimension_semantics=("parallel",) * len(grid),
            vmem_limit_bytes=vmem_limit,
        ),
        cost_estimate=_cost(x),
    )(x)


# ----------------------------------------------------------------------------
# Generic tiled transpose (unified batched / full fallback)
# ----------------------------------------------------------------------------
def _tiled_transpose_pallas(x, perm, block_budget, vmem_limit):
    """General permutation: grid over one output axis, layout-conforming tiles."""
    ndim = x.ndim
    out_shape = tuple(x.shape[p] for p in perm)
    itemsize = int(x.dtype.itemsize)
    sublane = max(8, (8 * 4) // max(1, itemsize))
    total_bytes = int(x.size) * itemsize

    best = None  # (score, j, q, t)
    for j in range(max(0, ndim - 1)):        # never tile the output's last dim
        q = perm[j]
        S = x.shape[q]
        per_unit = total_bytes // max(1, S)
        for t in range(1, S + 1):
            if S % t:
                continue
            # input-block layout rules
            if q == ndim - 1 and (t % 128) and t != S:
                continue
            if q == ndim - 2 and (t % sublane) and t != S:
                continue
            # output-block layout rules (j may be the output's 2nd-minor dim)
            if j == ndim - 2 and (t % sublane) and t != S:
                continue
            blk_bytes = per_unit * t
            if blk_bytes > block_budget:
                continue
            steps = S // t
            score = (1 if steps >= 2 else 0, blk_bytes, -j)
            if best is None or score > best[0]:
                best = (score, j, q, t)

    if best is not None:
        _, j, q, t = best
        grid = (x.shape[q] // t,)
        in_block = list(x.shape)
        in_block[q] = t
        out_block = list(out_shape)
        out_block[j] = t

        def in_idx(i):
            idx = [0] * ndim
            idx[q] = i
            return tuple(idx)

        def out_idx(i):
            idx = [0] * ndim
            idx[j] = i
            return tuple(idx)

        semantics = ("parallel",)
    else:
        # Last resort (tiny / 2-D / indivisible shapes): whole array as one block.
        grid = (1,)
        in_block, out_block = list(x.shape), list(out_shape)
        in_idx = lambda i: (0,) * ndim
        out_idx = lambda i: (0,) * ndim
        semantics = ("arbitrary",)

    def kernel(x_ref, o_ref):
        o_ref[...] = jnp.transpose(x_ref[...], perm)

    return pl.pallas_call(
        kernel,
        out_shape=jax.ShapeDtypeStruct(out_shape, x.dtype),
        grid_spec=pltpu.PrefetchScalarGridSpec(
            num_scalar_prefetch=0,
            grid=grid,
            in_specs=[pl.BlockSpec(tuple(in_block), in_idx)],
            out_specs=pl.BlockSpec(tuple(out_block), out_idx),
        ),
        compiler_params=pltpu.CompilerParams(
            dimension_semantics=semantics,
            vmem_limit_bytes=vmem_limit,
        ),
        cost_estimate=_cost(x),
    )(x)


# ----------------------------------------------------------------------------
# Dispatch + module wrapper
# ----------------------------------------------------------------------------
def permute_pallas(x, perm):
    """Pallas equivalent of torch.Tensor.permute(*perm)."""
    perm = tuple(int(p) for p in perm)
    assert len(perm) == x.ndim and sorted(perm) == list(range(x.ndim)), perm

    if perm == tuple(range(x.ndim)):
        return x  # identity permutation is a no-op view in torch as well

    block_budget, vmem_limit = _budgets()

    if x.ndim == 4 and perm == (0, 2, 3, 1):
        return _nchw_to_nhwc_pallas(x, block_budget, vmem_limit)
    if x.ndim >= 3 and perm[-1] == x.ndim - 1 and perm[-2] == x.ndim - 2:
        return _leading_permute_dma_pallas(x, perm, block_budget, vmem_limit)
    return _tiled_transpose_pallas(x, perm, block_budget, vmem_limit)


class Permute:
    """Mirror of the PyTorch nn.Module (no parameters)."""

    def __init__(self, perm):
        self.perm = tuple(perm)

    def __call__(self, x):
        return permute_pallas(x, self.perm)


if __name__ == "__main__":
    key = jax.random.PRNGKey(0)
    # Small NCHW input consistent with the module's usage.
    x = jax.random.normal(key, (2, 4, 16, 16), dtype=jnp.float32)

    # 1) Primary case: NCHW -> NHWC via the grouped lane-dense path.
    perm = (0, 2, 3, 1)
    out = jax.block_until_ready(Permute(perm)(x))
    ref = jnp.transpose(x, perm)
    assert out.shape == ref.shape and out.dtype == ref.dtype
    assert bool(jnp.array_equal(out, ref)), "NCHW->NHWC mismatch"

    # 2) Leading-axis-only permutation: folded pure-DMA path.
    perm2 = (1, 0, 2, 3)
    out2 = jax.block_until_ready(Permute(perm2)(x))
    assert bool(jnp.array_equal(out2, jnp.transpose(x, perm2))), "DMA path mismatch"

    # 3) Generic tiled transpose fallback (sublane swap, lane axis fixed).
    perm3 = (0, 2, 1, 3)
    out3 = jax.block_until_ready(Permute(perm3)(x))
    assert bool(jnp.array_equal(out3, jnp.transpose(x, perm3))), "tiled transpose mismatch"

    print("KERNEL_OK")
</pallas_src>

<mosaic_0001>
module attributes {stable_mosaic.version = 11 : i64} {
  func.func @kernel(%arg0: i32, %arg1: i32, %arg2: memref<1x4x256xf32, #tpu.memory_space<vmem>>, %arg3: memref<1x8x128xf32, #tpu.memory_space<vmem>>) attributes {dimension_semantics = [#tpu.dimension_semantics<parallel>, #tpu.dimension_semantics<parallel>], iteration_bounds = array<i64: 2, 1>, scalar_prefetch = 0 : i64, scratch_operands = 0 : i64, tpu.core_type = #tpu.core_type<tc>, window_params = [{transform_indices = @transform_0, window_bounds = array<i64: 1, 4, 256>}, {transform_indices = @transform_1, window_bounds = array<i64: 1, 8, 128>}]} {
    %c0 = arith.constant 0 : index
    %c0_0 = arith.constant 0 : index
    %c0_1 = arith.constant 0 : index
    %0 = vector.load %arg2[%c0, %c0_0, %c0_1] : memref<1x4x256xf32, #tpu.memory_space<vmem>>, vector<1x4x256xf32>
    %1 = vector.shape_cast %0 : vector<1x4x256xf32> to vector<4x256xf32>
    %2 = vector.shape_cast %1 : vector<4x256xf32> to vector<4x8x32xf32>
    %3 = tpu.transpose %2, [1, 2, 0] : vector<4x8x32xf32> -> vector<8x32x4xf32>
    %4 = vector.shape_cast %3 : vector<8x32x4xf32> to vector<8x128xf32>
    %c0_2 = arith.constant 0 : index
    %c0_3 = arith.constant 0 : index
    %c0_4 = arith.constant 0 : index
    %5 = vector.load %arg3[%c0_2, %c0_3, %c0_4] : memref<1x8x128xf32, #tpu.memory_space<vmem>>, vector<1x8x128xf32>
    %6 = vector.shape_cast %5 : vector<1x8x128xf32> to vector<8x128xf32>
    %7 = vector.shape_cast %4 : vector<8x128xf32> to vector<1x8x128xf32>
    tpu.vector_store %arg3[%c0_2, %c0_3, %c0_4], %7 {strides = array<i32>} : memref<1x8x128xf32, #tpu.memory_space<vmem>>, vector<1x8x128xf32>,
    return
  }
  func.func @transform_0(%arg0: i32, %arg1: i32) -> (i32, i32, i32) {
    %c0_i32 = arith.constant 0 : i32
    %c0_i32_0 = arith.constant 0 : i32
    return %arg0, %c0_i32, %arg1 : i32, i32, i32
  }
  func.func @transform_1(%arg0: i32, %arg1: i32) -> (i32, i32, i32) {
    %c0_i32 = arith.constant 0 : i32
    %c0_i32_0 = arith.constant 0 : i32
    return %arg0, %arg1, %c0_i32 : i32, i32, i32
  }
}

</mosaic_0001>

<llo_original>
// kernel: tpu_custom_call.1
$region0: #{tpu_custom_call.1}
  #allocation0 [shape = 'u32[]', space=smem, size = 0x4, offset = 0x4, fixed_abs, tag = 'smem constant byte address 0x4 - core index']
  #allocation1 [shape = 'u32[144,128]{1,0:T(1,128)}', space=vmem, size = 0x12000, scoped, tag = 'internal scratch']
  %s0 = inlined_call_operand.hbm [shape: f32[2,4,256], index: 0, kind: input, shape index: {}]
  %s1 = inlined_call_operand.hbm [shape: f32[2,8,128], index: 1, kind: output, shape index: {}]
  %s2 = sld [smem:[#allocation0]]
  $region41: #{tpu_custom_call.1} parent=0
    _
  %s4 = ssub.s32 1, %s2
  %s5 = scalar_select 0, %s4, %s2
  $region1: #{tpu_custom_call.1} parent=0
    #allocation2 [shape = 'u8[8192]{0}', space=vmem, size = 0x2000, scoped, tag = 'input window, operand 0']
    #allocation3 [shape = 's32[2]{0}', space=sflag, size = 0x8, scoped, tag = 'scoped memory for tpu_custom_call.1']
    #allocation4 [shape = 's32[2]{0}', space=sflag, size = 0x8, scoped, tag = 'scoped memory for tpu_custom_call.1']
    #allocation5 [shape = 'u8[8192]{0}', space=vmem, size = 0x2000, scoped, tag = 'output window, operand 0']
    %6 = vsyncpa [#allocation3], 0
    %s7 = scalar_lea.sflag [#allocation3], 1
    %8 = vsyncpa %s7, 0
    %9 = vsyncpa [#allocation4], 0
    %s10 = scalar_lea.sflag [#allocation4], 1
    %11 = vsyncpa %s10, 0
    loop: start=0, step=1, limit=4
    $region2: #{tpu_custom_call.1} parent=1 // loop_pre_header
      _
    $region3: #{tpu_custom_call.1} parent=1 // loop_header
      %s13 = sphi 0, %s17
      %p14 = scmp.ge.s32.totalorder %s13, 4
      %s20 = sphi 0, %s32
      %s21 = sphi 0, %s28
      %s22 = sphi 0, %s20
      %s23 = sphi 0, %s21
      %s24 = sphi 0, %s22
      %s25 = sphi 0, %s23
      %s37 = sphi 0, %s39
      %s40 = sphi 0, %s37
      %s41 = sphi 0, %s40
      %s57 = sphi 0, %s41
      %s65 = sphi 0, %s67
      %s68 = sphi 0, %s65
      %s69 = sphi 0, %s68
      %s85 = sphi 0, %s69
    $region4: #{tpu_custom_call.1} parent=1 // loop_header_branch
      %16 = sbr.rel (%p14) target = $region8
    $region5: #{tpu_custom_call.1} parent=1 // loop_body
      %s18 = ssub.s32 %s13, 1
      %s19 = ssub.s32 %s13, 2
      %s26 = sadd.s32 1, %s21
      %p27 = scmp.ge.s32.totalorder %s26, 1
      %s28 = scalar_select %p27, 0, %s26
      %s29 = sadd.s32 1, %s20
      %s30 = scalar_select %p27, %s29, %s20
      %p31 = scmp.ge.s32.totalorder %s30, 2
      %s32 = scalar_select %p31, 0, %s30
      %s33 = ssub.s32 %s20, %s32
      %s34 = ssub.s32 %s21, %s28
      %s35 = sor.u32 %s33, %s34
      %p36 = scmp.eq.s32.totalorder %s35, 0
      %s38 = sadd.s32 %s37, 1
      %s39 = scalar_select %p36, %s37, %s38
      %p42 = pneg %p36
      %p43 = scmp.eq.s32.totalorder %s13, 1
      %p44 = por %p42, %p43
      %p45 = scmp.ne.s32.totalorder %s37, %s40
      %p46 = scmp.eq.s32.totalorder %s13, 0
      %p47 = por %p45, %p46
      %p48 = scmp.ne.s32.totalorder %s37, %s40
      %p49 = scmp.eq.s32.totalorder %s18, 1
      %p50 = por %p48, %p49
      %p51 = scmp.ne.s32.totalorder %s40, %s41
      %p52 = scmp.eq.s32.totalorder %s18, 0
      %p53 = por %p51, %p52
      %p54 = scmp.ne.s32.totalorder %s40, %s41
      %p55 = scmp.eq.s32.totalorder %s19, 1
      %p56 = por %p54, %p55
      %p58 = scmp.ne.s32.totalorder %s41, %s57
      %p59 = scmp.eq.s32.totalorder %s19, 0
      %p60 = por %p58, %p59
      %s61 = ssub.s32 %s20, %s32
      %s62 = ssub.s32 %s21, %s28
      %s63 = sor.u32 %s61, %s62
      %p64 = scmp.eq.s32.totalorder %s63, 0
      %s66 = sadd.s32 %s65, 1
      %s67 = scalar_select %p64, %s65, %s66
      %p70 = pneg %p64
      %p71 = scmp.eq.s32.totalorder %s13, 1
      %p72 = por %p70, %p71
      %p73 = scmp.ne.s32.totalorder %s65, %s68
      %p74 = scmp.eq.s32.totalorder %s13, 0
      %p75 = por %p73, %p74
      %p76 = scmp.ne.s32.totalorder %s65, %s68
      %p77 = scmp.eq.s32.totalorder %s18, 1
      %p78 = por %p76, %p77
      %p79 = scmp.ne.s32.totalorder %s68, %s69
      %p80 = scmp.eq.s32.totalorder %s18, 0
      %p81 = por %p79, %p80
      %p82 = scmp.ne.s32.totalorder %s68, %s69
      %p83 = scmp.eq.s32.totalorder %s19, 1
      %p84 = por %p82, %p83
      %p86 = scmp.ne.s32.totalorder %s69, %s85
      %p87 = scmp.eq.s32.totalorder %s19, 0
      %p88 = por %p86, %p87
      %p89 = scmp.le.s32.totalorder 1, %s13
      %p90 = scmp.lt.s32.totalorder %s13, 3
      %p91 = pnand %p89, %p90
      %p92 = pneg %p91
      // Predicated region
      $region9: #{tpu_custom_call.1} parent=5 // pred_check
        _
      $region10: #{tpu_custom_call.1} parent=5 // pred_check_branch
        %94 = sbr.rel (%p91) target = $region12
      $region11: #{tpu_custom_call.1} parent=5 // pred_region
        %s95 = ssub.s32 %s13, 1
      $region12: #{tpu_custom_call.1} parent=5 // pred_fallthru
        _
      %p96 = scmp.lt.s32.totalorder %s13, 2
      // Predicated region
      $region13: #{tpu_custom_call.1} parent=5 // pred_check
        %p97 = pneg %p96
      $region14: #{tpu_custom_call.1} parent=5 // pred_check_branch
        %99 = sbr.rel (%p97) target = $region16
      $region15: #{tpu_custom_call.1} parent=5 // pred_region
        // Predicated region
        $region17: #{tpu_custom_call.1} parent=15 // pred_check
          %p100 = pneg %p47
        $region18: #{tpu_custom_call.1} parent=15 // pred_check_branch
          %102 = sbr.rel (%p100) target = $region20
        $region19: #{tpu_custom_call.1} parent=15 // pred_region
          %s103 = sand.u32 %s37, 1
          %s104 = scalar_lea.sflag [#allocation3], %s103
          %s105 = sand.u32 %s37, 1
          %s106 = smul.addr %s105, 8
          %s107 = scalar_lea.vmem [#allocation2], %s106
          %s108 = smul.u32 2, %s21
          %s110 = ssub.s32 128, 128
          %111 = vsyncadd %s104, %s110
          %s112 = smul.addr %s20, 2
          %s113 = sadd.s32 %s108, %s112
          %s114 = smul.addr %s113, 64
          %s115 = scalar_lea.hbm %s0, %s114
          %s117 = sshll.u32 %s107, 4
          %s118 = int_to_ptr.vmem [resolvable:$true] %s117
          %120 = dma.hbm_to_vmem [thread:$0]  %s115, 128, %s118, %s104
        $region20: #{tpu_custom_call.1} parent=15 // pred_fallthru
          _
      $region16: #{tpu_custom_call.1} parent=5 // pred_fallthru
        _
      %p121 = scmp.le.s32.totalorder 1, %s13
      %p122 = scmp.lt.s32.totalorder %s13, 3
      %p123 = pnand %p121, %p122
      %p124 = pneg %p123
      // Predicated region
      $region21: #{tpu_custom_call.1} parent=5 // pred_check
        _
      $region22: #{tpu_custom_call.1} parent=5 // pred_check_branch
        %126 = sbr.rel (%p123) target = $region24
      $region23: #{tpu_custom_call.1} parent=5 // pred_region
        %s127 = ssub.s32 %s13, 1
        %s128 = sand.u32 %s40, 1
        %s129 = scalar_lea.sflag [#allocation3], %s128
        %s130 = sand.u32 %s40, 1
        %s131 = smul.addr %s130, 8
        %s132 = scalar_lea.vmem [#allocation2], %s131
        // Predicated region
        $region25: #{tpu_custom_call.1} parent=23 // pred_check
          %p133 = pneg %p53
        $region26: #{tpu_custom_call.1} parent=23 // pred_check_branch
          %135 = sbr.rel (%p133) target = $region28
        $region27: #{tpu_custom_call.1} parent=23 // pred_region
          %136 = dma.done %s129, 128
        $region28: #{tpu_custom_call.1} parent=23 // pred_fallthru
          _
        %s137 = sand.u32 %s40, 1
        %s138 = scalar_lea.sflag [#allocation3], %s137
        %s139 = sand.u32 %s40, 1
        %s140 = smul.addr %s139, 8
        %s141 = scalar_lea.vmem [#allocation2], %s140
        %p142 = pneg %p53
        %p143 = pneg %p50
        %p144 = pneg %p81
        %p145 = pneg %p78
        %s146 = sand.u32 %s68, 1
        %s147 = scalar_lea.sflag [#allocation4], %s146
        %s148 = sand.u32 %s68, 1
        %s149 = smul.addr %s148, 8
        %s150 = scalar_lea.vmem [#allocation5], %s149
        %s151 = smul.u32 2, %s23
        %v152 = vld [vmem:[%s132] sm:$0xff]
        %v154 = vrot.slane %v152, 4
        %156 = vrot.lane.b32.xlu0 %v152, 96
        %v157 = vpop.permute.xlu0 %156
        %v158 = vrot.slane %v157, 4
        %160 = vrot.lane.b32.xlu0 %v152, 64
        %v161 = vpop.permute.xlu0 %160
        %v162 = vrot.slane %v161, 4
        %164 = vrot.lane.b32.xlu0 %v152, 32
        %v165 = vpop.permute.xlu0 %164
        %v166 = vrot.slane %v165, 4
        %v171 = vcombine.low %v152, %v161
        %v173 = vunpack.c.l.s4 1983009808
        %v174 = vunpack.c.0.s8 %v173
        %v175 = vlaneseq
        %v176 = vshrl.u32 %v175, 7
        %v177 = vsub.s32 %v174, %v176
        %v178 = vrot.slane %v171, %v177
        %v179 = vcombine.low %v157, %v165
        %v181 = vunpack.c.l.s4 1983009808
        %v182 = vunpack.c.0.s8 %v181
        %v183 = vlaneseq
        %v184 = vshrl.u32 %v183, 7
        %v185 = vsub.s32 %v182, %v184
        %v186 = vrot.slane %v179, %v185
        %v187 = vcombine.low %v178, %v186
        %v188 = vcombine.high %v178, %v186
        %v190 = vunpack.c.l.s4 1934713408
        %v191 = vunpack.c.0.s8 %v190
        %v192 = vlaneseq
        %v193 = vshrl.u32 %v192, 7
        %v194 = vsub.s32 %v191, %v193
        %v195 = vrot.slane %v187, %v194
        %v197 = vunpack.c.l.s4 1934713408
        %v198 = vunpack.c.0.s8 %v197
        %v199 = vlaneseq
        %v200 = vshrl.u32 %v199, 7
        %v201 = vsub.s32 %v198, %v200
        %v202 = vrot.slane %v188, %v201
        %v203 = vcombine.high %v195, 0.0
        %v204 = vcombine.high %v202, 0.0
        %v205 = vcombine.low %v154, %v162
        %v207 = vunpack.c.l.s4 1983009808
        %v208 = vunpack.c.0.s8 %v207
        %v209 = vlaneseq
        %v210 = vshrl.u32 %v209, 7
        %v211 = vsub.s32 %v208, %v210
        %v212 = vrot.slane %v205, %v211
        %v213 = vcombine.low %v158, %v166
        %v215 = vunpack.c.l.s4 1983009808
        %v216 = vunpack.c.0.s8 %v215
        %v217 = vlaneseq
        %v218 = vshrl.u32 %v217, 7
        %v219 = vsub.s32 %v216, %v218
        %v220 = vrot.slane %v213, %v219
        %v221 = vcombine.low %v212, %v220
        %v222 = vcombine.high %v212, %v220
        %v224 = vunpack.c.l.s4 1934713408
        %v225 = vunpack.c.0.s8 %v224
        %v226 = vlaneseq
        %v227 = vshrl.u32 %v226, 7
        %v228 = vsub.s32 %v225, %v227
        %v229 = vrot.slane %v221, %v228
        %v231 = vunpack.c.l.s4 1934713408
        %v232 = vunpack.c.0.s8 %v231
        %v233 = vlaneseq
        %v234 = vshrl.u32 %v233, 7
        %v235 = vsub.s32 %v232, %v234
        %v236 = vrot.slane %v222, %v235
        %v237 = vcombine.high %v229, 0.0
        %v238 = vcombine.high %v236, 0.0
        %v247 = vcombine.low %v195, %v229
        %v248 = vcombine.low %v203, %v237
        %v249 = vcombine.low %v202, %v236
        %v250 = vcombine.low %v204, %v238
        %255 = vxpose.xlu0.b32.start [1/16] %v247, 128
        %256 = vxpose.xlu0.b32.cont [2/16] 0.0, 128
        %257 = vxpose.xlu0.b32.cont [3/16] 0.0, 128
        %258 = vxpose.xlu0.b32.cont [4/16] 0.0, 128
        %259 = vxpose.xlu0.b32.cont [5/16] 0.0, 128
        %260 = vxpose.xlu0.b32.cont [6/16] 0.0, 128
        %261 = vxpose.xlu0.b32.cont [7/16] 0.0, 128
        %262 = vxpose.xlu0.b32.cont [8/16] 0.0, 128
        %263 = vxpose.xlu0.b32.cont [9/16] 0.0, 128
        %264 = vxpose.xlu0.b32.cont [10/16] 0.0, 128
        %265 = vxpose.xlu0.b32.cont [11/16] 0.0, 128
        %266 = vxpose.xlu0.b32.cont [12/16] 0.0, 128
        %267 = vxpose.xlu0.b32.cont [13/16] 0.0, 128
        %268 = vxpose.xlu0.b32.cont [14/16] 0.0, 128
        %269 = vxpose.xlu0.b32.cont [15/16] 0.0, 128
        %270 = vxpose.xlu0.b32.end [16/16] 0.0, 128
        %v271 = vpop.trf.xlu0
        %v272 = vpop.trf.xlu0
        %v273 = vpop.trf.xlu0
        %v274 = vpop.trf.xlu0
        %v275 = vpop.trf.xlu0
        %v276 = vpop.trf.xlu0
        %v277 = vpop.trf.xlu0
        %v278 = vpop.trf.xlu0
        %v279 = vpop.trf.xlu0
        %v280 = vpop.trf.xlu0
        %v281 = vpop.trf.xlu0
        %v282 = vpop.trf.xlu0
        %v283 = vpop.trf.xlu0
        %v284 = vpop.trf.xlu0
        %v285 = vpop.trf.xlu0
        %v286 = vpop.trf.xlu0
        %287 = vxpose.xlu0.b32.start [1/16] %v248, 128
        %288 = vxpose.xlu0.b32.cont [2/16] 0.0, 128
        %289 = vxpose.xlu0.b32.cont [3/16] 0.0, 128
        %290 = vxpose.xlu0.b32.cont [4/16] 0.0, 128
        %291 = vxpose.xlu0.b32.cont [5/16] 0.0, 128
        %292 = vxpose.xlu0.b32.cont [6/16] 0.0, 128
        %293 = vxpose.xlu0.b32.cont [7/16] 0.0, 128
        %294 = vxpose.xlu0.b32.cont [8/16] 0.0, 128
        %295 = vxpose.xlu0.b32.cont [9/16] 0.0, 128
        %296 = vxpose.xlu0.b32.cont [10/16] 0.0, 128
        %297 = vxpose.xlu0.b32.cont [11/16] 0.0, 128
        %298 = vxpose.xlu0.b32.cont [12/16] 0.0, 128
        %299 = vxpose.xlu0.b32.cont [13/16] 0.0, 128
        %300 = vxpose.xlu0.b32.cont [14/16] 0.0, 128
        %301 = vxpose.xlu0.b32.cont [15/16] 0.0, 128
        %302 = vxpose.xlu0.b32.end [16/16] 0.0, 128
        %v303 = vpop.trf.xlu0
        %v304 = vpop.trf.xlu0
        %v305 = vpop.trf.xlu0
        %v306 = vpop.trf.xlu0
        %v307 = vpop.trf.xlu0
        %v308 = vpop.trf.xlu0
        %v309 = vpop.trf.xlu0
        %v310 = vpop.trf.xlu0
        %v311 = vpop.trf.xlu0
        %v312 = vpop.trf.xlu0
        %v313 = vpop.trf.xlu0
        %v314 = vpop.trf.xlu0
        %v315 = vpop.trf.xlu0
        %v316 = vpop.trf.xlu0
        %v317 = vpop.trf.xlu0
        %v318 = vpop.trf.xlu0
        %319 = vxpose.xlu0.b32.start [1/16] %v249, 128
        %320 = vxpose.xlu0.b32.cont [2/16] 0.0, 128
        %321 = vxpose.xlu0.b32.cont [3/16] 0.0, 128
        %322 = vxpose.xlu0.b32.cont [4/16] 0.0, 128
        %323 = vxpose.xlu0.b32.cont [5/16] 0.0, 128
        %324 = vxpose.xlu0.b32.cont [6/16] 0.0, 128
        %325 = vxpose.xlu0.b32.cont [7/16] 0.0, 128
        %326 = vxpose.xlu0.b32.cont [8/16] 0.0, 128
        %327 = vxpose.xlu0.b32.cont [9/16] 0.0, 128
        %328 = vxpose.xlu0.b32.cont [10/16] 0.0, 128
        %329 = vxpose.xlu0.b32.cont [11/16] 0.0, 128
        %330 = vxpose.xlu0.b32.cont [12/16] 0.0, 128
        %331 = vxpose.xlu0.b32.cont [13/16] 0.0, 128
        %332 = vxpose.xlu0.b32.cont [14/16] 0.0, 128
        %333 = vxpose.xlu0.b32.cont [15/16] 0.0, 128
        %334 = vxpose.xlu0.b32.end [16/16] 0.0, 128
        %v335 = vpop.trf.xlu0
        %v336 = vpop.trf.xlu0
        %v337 = vpop.trf.xlu0
        %v338 = vpop.trf.xlu0
        %v339 = vpop.trf.xlu0
        %v340 = vpop.trf.xlu0
        %v341 = vpop.trf.xlu0
        %v342 = vpop.trf.xlu0
        %v343 = vpop.trf.xlu0
        %v344 = vpop.trf.xlu0
        %v345 = vpop.trf.xlu0
        %v346 = vpop.trf.xlu0
        %v347 = vpop.trf.xlu0
        %v348 = vpop.trf.xlu0
        %v349 = vpop.trf.xlu0
        %v350 = vpop.trf.xlu0
        %351 = vxpose.xlu0.b32.start [1/16] %v250, 128
        %352 = vxpose.xlu0.b32.cont [2/16] 0.0, 128
        %353 = vxpose.xlu0.b32.cont [3/16] 0.0, 128
        %354 = vxpose.xlu0.b32.cont [4/16] 0.0, 128
        %355 = vxpose.xlu0.b32.cont [5/16] 0.0, 128
        %356 = vxpose.xlu0.b32.cont [6/16] 0.0, 128
        %357 = vxpose.xlu0.b32.cont [7/16] 0.0, 128
        %358 = vxpose.xlu0.b32.cont [8/16] 0.0, 128
        %359 = vxpose.xlu0.b32.cont [9/16] 0.0, 128
        %360 = vxpose.xlu0.b32.cont [10/16] 0.0, 128
        %361 = vxpose.xlu0.b32.cont [11/16] 0.0, 128
        %362 = vxpose.xlu0.b32.cont [12/16] 0.0, 128
        %363 = vxpose.xlu0.b32.cont [13/16] 0.0, 128
        %364 = vxpose.xlu0.b32.cont [14/16] 0.0, 128
        %365 = vxpose.xlu0.b32.cont [15/16] 0.0, 128
        %366 = vxpose.xlu0.b32.end [16/16] 0.0, 128
        %v367 = vpop.trf.xlu0
        %v368 = vpop.trf.xlu0
        %v369 = vpop.trf.xlu0
        %v370 = vpop.trf.xlu0
        %v371 = vpop.trf.xlu0
        %v372 = vpop.trf.xlu0
        %v373 = vpop.trf.xlu0
        %v374 = vpop.trf.xlu0
        %v375 = vpop.trf.xlu0
        %v376 = vpop.trf.xlu0
        %v377 = vpop.trf.xlu0
        %v378 = vpop.trf.xlu0
        %v379 = vpop.trf.xlu0
        %v380 = vpop.trf.xlu0
        %v381 = vpop.trf.xlu0
        %v382 = vpop.trf.xlu0
        %v383 = vcombine.low %v271, %v335
        %v384 = vcombine.high %v271, %v335
        %v386 = vunpack.c.l.s4 1983009808
        %v387 = vunpack.c.0.s8 %v386
        %v388 = vlaneseq
        %v389 = vshrl.u32 %v388, 7
        %v390 = vsub.s32 %v387, %v389
        %v391 = vrot.slane %v383, %v390
        %v393 = vunpack.c.l.s4 1983009808
        %v394 = vunpack.c.0.s8 %v393
        %v395 = vlaneseq
        %v396 = vshrl.u32 %v395, 7
        %v397 = vsub.s32 %v394, %v396
        %v398 = vrot.slane %v384, %v397
        %v399 = vcombine.low %v303, %v367
        %v400 = vcombine.high %v303, %v367
        %v402 = vunpack.c.l.s4 1983009808
        %v403 = vunpack.c.0.s8 %v402
        %v404 = vlaneseq
        %v405 = vshrl.u32 %v404, 7
        %v406 = vsub.s32 %v403, %v405
        %v407 = vrot.slane %v399, %v406
        %v409 = vunpack.c.l.s4 1983009808
        %v410 = vunpack.c.0.s8 %v409
        %v411 = vlaneseq
        %v412 = vshrl.u32 %v411, 7
        %v413 = vsub.s32 %v410, %v412
        %v414 = vrot.slane %v400, %v413
        %v415 = vcombine.low %v391, %v407
        %v416 = vcombine.high %v391, %v407
        %v418 = vunpack.c.l.s4 1934713408
        %v419 = vunpack.c.0.s8 %v418
        %v420 = vlaneseq
        %v421 = vshrl.u32 %v420, 7
        %v422 = vsub.s32 %v419, %v421
        %v423 = vrot.slane %v415, %v422
        %v425 = vunpack.c.l.s4 1934713408
        %v426 = vunpack.c.0.s8 %v425
        %v427 = vlaneseq
        %v428 = vshrl.u32 %v427, 7
        %v429 = vsub.s32 %v426, %v428
        %v430 = vrot.slane %v416, %v429
        %v431 = vcombine.low %v398, %v414
        %v432 = vcombine.high %v398, %v414
        %v434 = vunpack.c.l.s4 1934713408
        %v435 = vunpack.c.0.s8 %v434
        %v436 = vlaneseq
        %v437 = vshrl.u32 %v436, 7
        %v438 = vsub.s32 %v435, %v437
        %v439 = vrot.slane %v431, %v438
        %v441 = vunpack.c.l.s4 1934713408
        %v442 = vunpack.c.0.s8 %v441
        %v443 = vlaneseq
        %v444 = vshrl.u32 %v443, 7
        %v445 = vsub.s32 %v442, %v444
        %v446 = vrot.slane %v432, %v445
        %v447 = vcombine.high %v423, 0.0
        %v448 = vcombine.high %v430, 0.0
        %v449 = vcombine.high %v439, 0.0
        %v450 = vcombine.high %v446, 0.0
        %v451 = vcombine.low %v272, %v336
        %v452 = vcombine.high %v272, %v336
        %v454 = vunpack.c.l.s4 1983009808
        %v455 = vunpack.c.0.s8 %v454
        %v456 = vlaneseq
        %v457 = vshrl.u32 %v456, 7
        %v458 = vsub.s32 %v455, %v457
        %v459 = vrot.slane %v451, %v458
        %v461 = vunpack.c.l.s4 1983009808
        %v462 = vunpack.c.0.s8 %v461
        %v463 = vlaneseq
        %v464 = vshrl.u32 %v463, 7
        %v465 = vsub.s32 %v462, %v464
        %v466 = vrot.slane %v452, %v465
        %v467 = vcombine.low %v304, %v368
        %v468 = vcombine.high %v304, %v368
        %v470 = vunpack.c.l.s4 1983009808
        %v471 = vunpack.c.0.s8 %v470
        %v472 = vlaneseq
        %v473 = vshrl.u32 %v472, 7
        %v474 = vsub.s32 %v471, %v473
        %v475 = vrot.slane %v467, %v474
        %v477 = vunpack.c.l.s4 1983009808
        %v478 = vunpack.c.0.s8 %v477
        %v479 = vlaneseq
        %v480 = vshrl.u32 %v479, 7
        %v481 = vsub.s32 %v478, %v480
        %v482 = vrot.slane %v468, %v481
        %v483 = vcombine.low %v459, %v475
        %v484 = vcombine.high %v459, %v475
        %v486 = vunpack.c.l.s4 1934713408
        %v487 = vunpack.c.0.s8 %v486
        %v488 = vlaneseq
        %v489 = vshrl.u32 %v488, 7
        %v490 = vsub.s32 %v487, %v489
        %v491 = vrot.slane %v483, %v490
        %v493 = vunpack.c.l.s4 1934713408
        %v494 = vunpack.c.0.s8 %v493
        %v495 = vlaneseq
        %v496 = vshrl.u32 %v495, 7
        %v497 = vsub.s32 %v494, %v496
        %v498 = vrot.slane %v484, %v497
        %v499 = vcombine.low %v466, %v482
        %v500 = vcombine.high %v466, %v482
        %v502 = vunpack.c.l.s4 1934713408
        %v503 = vunpack.c.0.s8 %v502
        %v504 = vlaneseq
        %v505 = vshrl.u32 %v504, 7
        %v506 = vsub.s32 %v503, %v505
        %v507 = vrot.slane %v499, %v506
        %v509 = vunpack.c.l.s4 1934713408
        %v510 = vunpack.c.0.s8 %v509
        %v511 = vlaneseq
        %v512 = vshrl.u32 %v511, 7
        %v513 = vsub.s32 %v510, %v512
        %v514 = vrot.slane %v500, %v513
        %v515 = vcombine.high %v491, 0.0
        %v516 = vcombine.high %v498, 0.0
        %v517 = vcombine.high %v507, 0.0
        %v518 = vcombine.high %v514, 0.0
        %v519 = vcombine.low %v273, %v337
        %v520 = vcombine.high %v273, %v337
        %v522 = vunpack.c.l.s4 1983009808
        %v523 = vunpack.c.0.s8 %v522
        %v524 = vlaneseq
        %v525 = vshrl.u32 %v524, 7
        %v526 = vsub.s32 %v523, %v525
        %v527 = vrot.slane %v519, %v526
        %v529 = vunpack.c.l.s4 1983009808
        %v530 = vunpack.c.0.s8 %v529
        %v531 = vlaneseq
        %v532 = vshrl.u32 %v531, 7
        %v533 = vsub.s32 %v530, %v532
        %v534 = vrot.slane %v520, %v533
        %v535 = vcombine.low %v305, %v369
        %v536 = vcombine.high %v305, %v369
        %v538 = vunpack.c.l.s4 1983009808
        %v539 = vunpack.c.0.s8 %v538
        %v540 = vlaneseq
        %v541 = vshrl.u32 %v540, 7
        %v542 = vsub.s32 %v539, %v541
        %v543 = vrot.slane %v535, %v542
        %v545 = vunpack.c.l.s4 1983009808
        %v546 = vunpack.c.0.s8 %v545
        %v547 = vlaneseq
        %v548 = vshrl.u32 %v547, 7
        %v549 = vsub.s32 %v546, %v548
        %v550 = vrot.slane %v536, %v549
        %v551 = vcombine.low %v527, %v543
        %v552 = vcombine.high %v527, %v543
        %v554 = vunpack.c.l.s4 1934713408
        %v555 = vunpack.c.0.s8 %v554
        %v556 = vlaneseq
        %v557 = vshrl.u32 %v556, 7
        %v558 = vsub.s32 %v555, %v557
        %v559 = vrot.slane %v551, %v558
        %v561 = vunpack.c.l.s4 1934713408
        %v562 = vunpack.c.0.s8 %v561
        %v563 = vlaneseq
        %v564 = vshrl.u32 %v563, 7
        %v565 = vsub.s32 %v562, %v564
        %v566 = vrot.slane %v552, %v565
        %v567 = vcombine.low %v534, %v550
        %v568 = vcombine.high %v534, %v550
        %v570 = vunpack.c.l.s4 1934713408
        %v571 = vunpack.c.0.s8 %v570
        %v572 = vlaneseq
        %v573 = vshrl.u32 %v572, 7
        %v574 = vsub.s32 %v571, %v573
        %v575 = vrot.slane %v567, %v574
        %v577 = vunpack.c.l.s4 1934713408
        %v578 = vunpack.c.0.s8 %v577
        %v579 = vlaneseq
        %v580 = vshrl.u32 %v579, 7
        %v581 = vsub.s32 %v578, %v580
        %v582 = vrot.slane %v568, %v581
        %v583 = vcombine.high %v559, 0.0
        %v584 = vcombine.high %v566, 0.0
        %v585 = vcombine.high %v575, 0.0
        %v586 = vcombine.high %v582, 0.0
        %v587 = vcombine.low %v274, %v338
        %v588 = vcombine.high %v274, %v338
        %v590 = vunpack.c.l.s4 1983009808
        %v591 = vunpack.c.0.s8 %v590
        %v592 = vlaneseq
        %v593 = vshrl.u32 %v592, 7
        %v594 = vsub.s32 %v591, %v593
        %v595 = vrot.slane %v587, %v594
        %v597 = vunpack.c.l.s4 1983009808
        %v598 = vunpack.c.0.s8 %v597
        %v599 = vlaneseq
        %v600 = vshrl.u32 %v599, 7
        %v601 = vsub.s32 %v598, %v600
        %v602 = vrot.slane %v588, %v601
        %v603 = vcombine.low %v306, %v370
        %v604 = vcombine.high %v306, %v370
        %v606 = vunpack.c.l.s4 1983009808
        %v607 = vunpack.c.0.s8 %v606
        %v608 = vlaneseq
        %v609 = vshrl.u32 %v608, 7
        %v610 = vsub.s32 %v607, %v609
        %v611 = vrot.slane %v603, %v610
        %v613 = vunpack.c.l.s4 1983009808
        %v614 = vunpack.c.0.s8 %v613
        %v615 = vlaneseq
        %v616 = vshrl.u32 %v615, 7
        %v617 = vsub.s32 %v614, %v616
        %v618 = vrot.slane %v604, %v617
        %v619 = vcombine.low %v595, %v611
        %v620 = vcombine.high %v595, %v611
        %v622 = vunpack.c.l.s4 1934713408
        %v623 = vunpack.c.0.s8 %v622
        %v624 = vlaneseq
        %v625 = vshrl.u32 %v624, 7
        %v626 = vsub.s32 %v623, %v625
        %v627 = vrot.slane %v619, %v626
        %v629 = vunpack.c.l.s4 1934713408
        %v630 = vunpack.c.0.s8 %v629
        %v631 = vlaneseq
        %v632 = vshrl.u32 %v631, 7
        %v633 = vsub.s32 %v630, %v632
        %v634 = vrot.slane %v620, %v633
        %v635 = vcombine.low %v602, %v618
        %v636 = vcombine.high %v602, %v618
        %v638 = vunpack.c.l.s4 1934713408
        %v639 = vunpack.c.0.s8 %v638
        %v640 = vlaneseq
        %v641 = vshrl.u32 %v640, 7
        %v642 = vsub.s32 %v639, %v641
        %v643 = vrot.slane %v635, %v642
        %v645 = vunpack.c.l.s4 1934713408
        %v646 = vunpack.c.0.s8 %v645
        %v647 = vlaneseq
        %v648 = vshrl.u32 %v647, 7
        %v649 = vsub.s32 %v646, %v648
        %v650 = vrot.slane %v636, %v649
        %v651 = vcombine.high %v627, 0.0
        %v652 = vcombine.high %v634, 0.0
        %v653 = vcombine.high %v643, 0.0
        %v654 = vcombine.high %v650, 0.0
        %655 = vxpose.xlu0.b32.start [1/16] %v423, 128
        %656 = vxpose.xlu0.b32.cont [2/16] 0.0, 128
        %657 = vxpose.xlu0.b32.cont [3/16] 0.0, 128
        %658 = vxpose.xlu0.b32.cont [4/16] 0.0, 128
        %659 = vxpose.xlu0.b32.cont [5/16] 0.0, 128
        %660 = vxpose.xlu0.b32.cont [6/16] 0.0, 128
        %661 = vxpose.xlu0.b32.cont [7/16] 0.0, 128
        %662 = vxpose.xlu0.b32.cont [8/16] 0.0, 128
        %663 = vxpose.xlu0.b32.cont [9/16] 0.0, 128
        %664 = vxpose.xlu0.b32.cont [10/16] 0.0, 128
        %665 = vxpose.xlu0.b32.cont [11/16] 0.0, 128
        %666 = vxpose.xlu0.b32.cont [12/16] 0.0, 128
        %667 = vxpose.xlu0.b32.cont [13/16] 0.0, 128
        %668 = vxpose.xlu0.b32.cont [14/16] 0.0, 128
        %669 = vxpose.xlu0.b32.cont [15/16] 0.0, 128
        %670 = vxpose.xlu0.b32.end [16/16] 0.0, 128
        %v671 = vpop.trf.xlu0
        %v672 = vpop.trf.xlu0
        %v673 = vpop.trf.xlu0
        %v674 = vpop.trf.xlu0
        %v675 = vpop.trf.xlu0
        %v676 = vpop.trf.xlu0
        %v677 = vpop.trf.xlu0
        %v678 = vpop.trf.xlu0
        %v679 = vpop.trf.xlu0
        %v680 = vpop.trf.xlu0
        %v681 = vpop.trf.xlu0
        %v682 = vpop.trf.xlu0
        %v683 = vpop.trf.xlu0
        %v684 = vpop.trf.xlu0
        %v685 = vpop.trf.xlu0
        %v686 = vpop.trf.xlu0
        %687 = vxpose.xlu0.b32.start [1/16] %v447, 128
        %688 = vxpose.xlu0.b32.cont [2/16] 0.0, 128
        %689 = vxpose.xlu0.b32.cont [3/16] 0.0, 128
        %690 = vxpose.xlu0.b32.cont [4/16] 0.0, 128
        %691 = vxpose.xlu0.b32.cont [5/16] 0.0, 128
        %692 = vxpose.xlu0.b32.cont [6/16] 0.0, 128
        %693 = vxpose.xlu0.b32.cont [7/16] 0.0, 128
        %694 = vxpose.xlu0.b32.cont [8/16] 0.0, 128
        %695 = vxpose.xlu0.b32.cont [9/16] 0.0, 128
        %696 = vxpose.xlu0.b32.cont [10/16] 0.0, 128
        %697 = vxpose.xlu0.b32.cont [11/16] 0.0, 128
        %698 = vxpose.xlu0.b32.cont [12/16] 0.0, 128
        %699 = vxpose.xlu0.b32.cont [13/16] 0.0, 128
        %700 = vxpose.xlu0.b32.cont [14/16] 0.0, 128
        %701 = vxpose.xlu0.b32.cont [15/16] 0.0, 128
        %702 = vxpose.xlu0.b32.end [16/16] 0.0, 128
        %v703 = vpop.trf.xlu0
        %v704 = vpop.trf.xlu0
        %v705 = vpop.trf.xlu0
        %v706 = vpop.trf.xlu0
        %v707 = vpop.trf.xlu0
        %v708 = vpop.trf.xlu0
        %v709 = vpop.trf.xlu0
        %v710 = vpop.trf.xlu0
        %v711 = vpop.trf.xlu0
        %v712 = vpop.trf.xlu0
        %v713 = vpop.trf.xlu0
        %v714 = vpop.trf.xlu0
        %v715 = vpop.trf.xlu0
        %v716 = vpop.trf.xlu0
        %v717 = vpop.trf.xlu0
        %v718 = vpop.trf.xlu0
        %719 = vxpose.xlu0.b32.start [1/16] %v430, 128
        %720 = vxpose.xlu0.b32.cont [2/16] 0.0, 128
        %721 = vxpose.xlu0.b32.cont [3/16] 0.0, 128
        %722 = vxpose.xlu0.b32.cont [4/16] 0.0, 128
        %723 = vxpose.xlu0.b32.cont [5/16] 0.0, 128
        %724 = vxpose.xlu0.b32.cont [6/16] 0.0, 128
        %725 = vxpose.xlu0.b32.cont [7/16] 0.0, 128
        %726 = vxpose.xlu0.b32.cont [8/16] 0.0, 128
        %727 = vxpose.xlu0.b32.cont [9/16] 0.0, 128
        %728 = vxpose.xlu0.b32.cont [10/16] 0.0, 128
        %729 = vxpose.xlu0.b32.cont [11/16] 0.0, 128
        %730 = vxpose.xlu0.b32.cont [12/16] 0.0, 128
        %731 = vxpose.xlu0.b32.cont [13/16] 0.0, 128
        %732 = vxpose.xlu0.b32.cont [14/16] 0.0, 128
        %733 = vxpose.xlu0.b32.cont [15/16] 0.0, 128
        %734 = vxpose.xlu0.b32.end [16/16] 0.0, 128
        %v735 = vpop.trf.xlu0
        %v736 = vpop.trf.xlu0
        %v737 = vpop.trf.xlu0
        %v738 = vpop.trf.xlu0
        %v739 = vpop.trf.xlu0
        %v740 = vpop.trf.xlu0
        %v741 = vpop.trf.xlu0
        %v742 = vpop.trf.xlu0
        %v743 = vpop.trf.xlu0
        %v744 = vpop.trf.xlu0
        %v745 = vpop.trf.xlu0
        %v746 = vpop.trf.xlu0
        %v747 = vpop.trf.xlu0
        %v748 = vpop.trf.xlu0
        %v749 = vpop.trf.xlu0
        %v750 = vpop.trf.xlu0
        %751 = vxpose.xlu0.b32.start [1/16] %v448, 128
        %752 = vxpose.xlu0.b32.cont [2/16] 0.0, 128
        %753 = vxpose.xlu0.b32.cont [3/16] 0.0, 128
        %754 = vxpose.xlu0.b32.cont [4/16] 0.0, 128
        %755 = vxpose.xlu0.b32.cont [5/16] 0.0, 128
        %756 = vxpose.xlu0.b32.cont [6/16] 0.0, 128
        %757 = vxpose.xlu0.b32.cont [7/16] 0.0, 128
        %758 = vxpose.xlu0.b32.cont [8/16] 0.0, 128
        %759 = vxpose.xlu0.b32.cont [9/16] 0.0, 128
        %760 = vxpose.xlu0.b32.cont [10/16] 0.0, 128
        %761 = vxpose.xlu0.b32.cont [11/16] 0.0, 128
        %762 = vxpose.xlu0.b32.cont [12/16] 0.0, 128
        %763 = vxpose.xlu0.b32.cont [13/16] 0.0, 128
        %764 = vxpose.xlu0.b32.cont [14/16] 0.0, 128
        %765 = vxpose.xlu0.b32.cont [15/16] 0.0, 128
        %766 = vxpose.xlu0.b32.end [16/16] 0.0, 128
        %v767 = vpop.trf.xlu0
        %v768 = vpop.trf.xlu0
        %v769 = vpop.trf.xlu0
        %v770 = vpop.trf.xlu0
        %v771 = vpop.trf.xlu0
        %v772 = vpop.trf.xlu0
        %v773 = vpop.trf.xlu0
        %v774 = vpop.trf.xlu0
        %v775 = vpop.trf.xlu0
        %v776 = vpop.trf.xlu0
        %v777 = vpop.trf.xlu0
        %v778 = vpop.trf.xlu0
        %v779 = vpop.trf.xlu0
        %v780 = vpop.trf.xlu0
        %v781 = vpop.trf.xlu0
        %v782 = vpop.trf.xlu0
        %783 = vxpose.xlu0.b32.start [1/16] %v439, 128
        %784 = vxpose.xlu0.b32.cont [2/16] 0.0, 128
        %785 = vxpose.xlu0.b32.cont [3/16] 0.0, 128
        %786 = vxpose.xlu0.b32.cont [4/16] 0.0, 128
        %787 = vxpose.xlu0.b32.cont [5/16] 0.0, 128
        %788 = vxpose.xlu0.b32.cont [6/16] 0.0, 128
        %789 = vxpose.xlu0.b32.cont [7/16] 0.0, 128
        %790 = vxpose.xlu0.b32.cont [8/16] 0.0, 128
        %791 = vxpose.xlu0.b32.cont [9/16] 0.0, 128
        %792 = vxpose.xlu0.b32.cont [10/16] 0.0, 128
        %793 = vxpose.xlu0.b32.cont [11/16] 0.0, 128
        %794 = vxpose.xlu0.b32.cont [12/16] 0.0, 128
        %795 = vxpose.xlu0.b32.cont [13/16] 0.0, 128
        %796 = vxpose.xlu0.b32.cont [14/16] 0.0, 128
        %797 = vxpose.xlu0.b32.cont [15/16] 0.0, 128
        %798 = vxpose.xlu0.b32.end [16/16] 0.0, 128
        %v799 = vpop.trf.xlu0
        %v800 = vpop.trf.xlu0
        %v801 = vpop.trf.xlu0
        %v802 = vpop.trf.xlu0
        %v803 = vpop.trf.xlu0
        %v804 = vpop.trf.xlu0
        %v805 = vpop.trf.xlu0
        %v806 = vpop.trf.xlu0
        %v807 = vpop.trf.xlu0
        %v808 = vpop.trf.xlu0
        %v809 = vpop.trf.xlu0
        %v810 = vpop.trf.xlu0
        %v811 = vpop.trf.xlu0
        %v812 = vpop.trf.xlu0
        %v813 = vpop.trf.xlu0
        %v814 = vpop.trf.xlu0
        %815 = vxpose.xlu0.b32.start [1/16] %v449, 128
        %816 = vxpose.xlu0.b32.cont [2/16] 0.0, 128
        %817 = vxpose.xlu0.b32.cont [3/16] 0.0, 128
        %818 = vxpose.xlu0.b32.cont [4/16] 0.0, 128
        %819 = vxpose.xlu0.b32.cont [5/16] 0.0, 128
        %820 = vxpose.xlu0.b32.cont [6/16] 0.0, 128
        %821 = vxpose.xlu0.b32.cont [7/16] 0.0, 128
        %822 = vxpose.xlu0.b32.cont [8/16] 0.0, 128
        %823 = vxpose.xlu0.b32.cont [9/16] 0.0, 128
        %824 = vxpose.xlu0.b32.cont [10/16] 0.0, 128
        %825 = vxpose.xlu0.b32.cont [11/16] 0.0, 128
        %826 = vxpose.xlu0.b32.cont [12/16] 0.0, 128
        %827 = vxpose.xlu0.b32.cont [13/16] 0.0, 128
        %828 = vxpose.xlu0.b32.cont [14/16] 0.0, 128
        %829 = vxpose.xlu0.b32.cont [15/16] 0.0, 128
        %830 = vxpose.xlu0.b32.end [16/16] 0.0, 128
        %v831 = vpop.trf.xlu0
        %v832 = vpop.trf.xlu0
        %v833 = vpop.trf.xlu0
        %v834 = vpop.trf.xlu0
        %v835 = vpop.trf.xlu0
        %v836 = vpop.trf.xlu0
        %v837 = vpop.trf.xlu0
        %v838 = vpop.trf.xlu0
        %v839 = vpop.trf.xlu0
        %v840 = vpop.trf.xlu0
        %v841 = vpop.trf.xlu0
        %v842 = vpop.trf.xlu0
        %v843 = vpop.trf.xlu0
        %v844 = vpop.trf.xlu0
        %v845 = vpop.trf.xlu0
        %v846 = vpop.trf.xlu0
        %847 = vxpose.xlu0.b32.start [1/16] %v446, 128
        %848 = vxpose.xlu0.b32.cont [2/16] 0.0, 128
        %849 = vxpose.xlu0.b32.cont [3/16] 0.0, 128
        %850 = vxpose.xlu0.b32.cont [4/16] 0.0, 128
        %851 = vxpose.xlu0.b32.cont [5/16] 0.0, 128
        %852 = vxpose.xlu0.b32.cont [6/16] 0.0, 128
        %853 = vxpose.xlu0.b32.cont [7/16] 0.0, 128
        %854 = vxpose.xlu0.b32.cont [8/16] 0.0, 128
        %855 = vxpose.xlu0.b32.cont [9/16] 0.0, 128
        %856 = vxpose.xlu0.b32.cont [10/16] 0.0, 128
        %857 = vxpose.xlu0.b32.cont [11/16] 0.0, 128
        %858 = vxpose.xlu0.b32.cont [12/16] 0.0, 128
        %859 = vxpose.xlu0.b32.cont [13/16] 0.0, 128
        %860 = vxpose.xlu0.b32.cont [14/16] 0.0, 128
        %861 = vxpose.xlu0.b32.cont [15/16] 0.0, 128
        %862 = vxpose.xlu0.b32.end [16/16] 0.0, 128
        %v863 = vpop.trf.xlu0
        %v864 = vpop.trf.xlu0
        %v865 = vpop.trf.xlu0
        %v866 = vpop.trf.xlu0
        %v867 = vpop.trf.xlu0
        %v868 = vpop.trf.xlu0
        %v869 = vpop.trf.xlu0
        %v870 = vpop.trf.xlu0
        %v871 = vpop.trf.xlu0
        %v872 = vpop.trf.xlu0
        %v873 = vpop.trf.xlu0
        %v874 = vpop.trf.xlu0
        %v875 = vpop.trf.xlu0
        %v876 = vpop.trf.xlu0
        %v877 = vpop.trf.xlu0
        %v878 = vpop.trf.xlu0
        %879 = vxpose.xlu0.b32.start [1/16] %v450, 128
        %880 = vxpose.xlu0.b32.cont [2/16] 0.0, 128
        %881 = vxpose.xlu0.b32.cont [3/16] 0.0, 128
        %882 = vxpose.xlu0.b32.cont [4/16] 0.0, 128
        %883 = vxpose.xlu0.b32.cont [5/16] 0.0, 128
        %884 = vxpose.xlu0.b32.cont [6/16] 0.0, 128
        %885 = vxpose.xlu0.b32.cont [7/16] 0.0, 128
        %886 = vxpose.xlu0.b32.cont [8/16] 0.0, 128
        %887 = vxpose.xlu0.b32.cont [9/16] 0.0, 128
        %888 = vxpose.xlu0.b32.cont [10/16] 0.0, 128
        %889 = vxpose.xlu0.b32.cont [11/16] 0.0, 128
        %890 = vxpose.xlu0.b32.cont [12/16] 0.0, 128
        %891 = vxpose.xlu0.b32.cont [13/16] 0.0, 128
        %892 = vxpose.xlu0.b32.cont [14/16] 0.0, 128
        %893 = vxpose.xlu0.b32.cont [15/16] 0.0, 128
        %894 = vxpose.xlu0.b32.end [16/16] 0.0, 128
        %v895 = vpop.trf.xlu0
        %v896 = vpop.trf.xlu0
        %v897 = vpop.trf.xlu0
        %v898 = vpop.trf.xlu0
        %v899 = vpop.trf.xlu0
        %v900 = vpop.trf.xlu0
        %v901 = vpop.trf.xlu0
        %v902 = vpop.trf.xlu0
        %v903 = vpop.trf.xlu0
        %v904 = vpop.trf.xlu0
        %v905 = vpop.trf.xlu0
        %v906 = vpop.trf.xlu0
        %v907 = vpop.trf.xlu0
        %v908 = vpop.trf.xlu0
        %v909 = vpop.trf.xlu0
        %v910 = vpop.trf.xlu0
        %911 = vxpose.xlu0.b32.start [1/16] %v491, 128
        %912 = vxpose.xlu0.b32.cont [2/16] 0.0, 128
        %913 = vxpose.xlu0.b32.cont [3/16] 0.0, 128
        %914 = vxpose.xlu0.b32.cont [4/16] 0.0, 128
        %915 = vxpose.xlu0.b32.cont [5/16] 0.0, 128
        %916 = vxpose.xlu0.b32.cont [6/16] 0.0, 128
        %917 = vxpose.xlu0.b32.cont [7/16] 0.0, 128
        %918 = vxpose.xlu0.b32.cont [8/16] 0.0, 128
        %919 = vxpose.xlu0.b32.cont [9/16] 0.0, 128
        %920 = vxpose.xlu0.b32.cont [10/16] 0.0, 128
        %921 = vxpose.xlu0.b32.cont [11/16] 0.0, 128
        %922 = vxpose.xlu0.b32.cont [12/16] 0.0, 128
        %923 = vxpose.xlu0.b32.cont [13/16] 0.0, 128
        %924 = vxpose.xlu0.b32.cont [14/16] 0.0, 128
        %925 = vxpose.xlu0.b32.cont [15/16] 0.0, 128
        %926 = vxpose.xlu0.b32.end [16/16] 0.0, 128
        %v927 = vpop.trf.xlu0
        %v928 = vpop.trf.xlu0
        %v929 = vpop.trf.xlu0
        %v930 = vpop.trf.xlu0
        %v931 = vpop.trf.xlu0
        %v932 = vpop.trf.xlu0
        %v933 = vpop.trf.xlu0
        %v934 = vpop.trf.xlu0
        %v935 = vpop.trf.xlu0
        %v936 = vpop.trf.xlu0
        %v937 = vpop.trf.xlu0
        %v938 = vpop.trf.xlu0
        %v939 = vpop.trf.xlu0
        %v940 = vpop.trf.xlu0
        %v941 = vpop.trf.xlu0
        %v942 = vpop.trf.xlu0
        %943 = vxpose.xlu0.b32.start [1/16] %v515, 128
        %944 = vxpose.xlu0.b32.cont [2/16] 0.0, 128
        %945 = vxpose.xlu0.b32.cont [3/16] 0.0, 128
        %946 = vxpose.xlu0.b32.cont [4/16] 0.0, 128
        %947 = vxpose.xlu0.b32.cont [5/16] 0.0, 128
        %948 = vxpose.xlu0.b32.cont [6/16] 0.0, 128
        %949 = vxpose.xlu0.b32.cont [7/16] 0.0, 128
        %950 = vxpose.xlu0.b32.cont [8/16] 0.0, 128
        %951 = vxpose.xlu0.b32.cont [9/16] 0.0, 128
        %952 = vxpose.xlu0.b32.cont [10/16] 0.0, 128
        %953 = vxpose.xlu0.b32.cont [11/16] 0.0, 128
        %954 = vxpose.xlu0.b32.cont [12/16] 0.0, 128
        %955 = vxpose.xlu0.b32.cont [13/16] 0.0, 128
        %956 = vxpose.xlu0.b32.cont [14/16] 0.0, 128
        %957 = vxpose.xlu0.b32.cont [15/16] 0.0, 128
        %958 = vxpose.xlu0.b32.end [16/16] 0.0, 128
        %v959 = vpop.trf.xlu0
        %v960 = vpop.trf.xlu0
        %v961 = vpop.trf.xlu0
        %v962 = vpop.trf.xlu0
        %v963 = vpop.trf.xlu0
        %v964 = vpop.trf.xlu0
        %v965 = vpop.trf.xlu0
        %v966 = vpop.trf.xlu0
        %v967 = vpop.trf.xlu0
        %v968 = vpop.trf.xlu0
        %v969 = vpop.trf.xlu0
        %v970 = vpop.trf.xlu0
        %v971 = vpop.trf.xlu0
        %v972 = vpop.trf.xlu0
        %v973 = vpop.trf.xlu0
        %v974 = vpop.trf.xlu0
        %975 = vxpose.xlu0.b32.start [1/16] %v498, 128
        %976 = vxpose.xlu0.b32.cont [2/16] 0.0, 128
        %977 = vxpose.xlu0.b32.cont [3/16] 0.0, 128
        %978 = vxpose.xlu0.b32.cont [4/16] 0.0, 128
        %979 = vxpose.xlu0.b32.cont [5/16] 0.0, 128
        %980 = vxpose.xlu0.b32.cont [6/16] 0.0, 128
        %981 = vxpose.xlu0.b32.cont [7/16] 0.0, 128
        %982 = vxpose.xlu0.b32.cont [8/16] 0.0, 128
        %983 = vxpose.xlu0.b32.cont [9/16] 0.0, 128
        %984 = vxpose.xlu0.b32.cont [10/16] 0.0, 128
        %985 = vxpose.xlu0.b32.cont [11/16] 0.0, 128
        %986 = vxpose.xlu0.b32.cont [12/16] 0.0, 128
        %987 = vxpose.xlu0.b32.cont [13/16] 0.0, 128
        %988 = vxpose.xlu0.b32.cont [14/16] 0.0, 128
        %989 = vxpose.xlu0.b32.cont [15/16] 0.0, 128
        %990 = vxpose.xlu0.b32.end [16/16] 0.0, 128
        %v991 = vpop.trf.xlu0
        %v992 = vpop.trf.xlu0
        %v993 = vpop.trf.xlu0
        %v994 = vpop.trf.xlu0
        %v995 = vpop.trf.xlu0
        %v996 = vpop.trf.xlu0
        %v997 = vpop.trf.xlu0
        %v998 = vpop.trf.xlu0
        %v999 = vpop.trf.xlu0
        %v1000 = vpop.trf.xlu0
        %v1001 = vpop.trf.xlu0
        %v1002 = vpop.trf.xlu0
        %v1003 = vpop.trf.xlu0
        %v1004 = vpop.trf.xlu0
        %v1005 = vpop.trf.xlu0
        %v1006 = vpop.trf.xlu0
        %1007 = vxpose.xlu0.b32.start [1/16] %v516, 128
        %1008 = vxpose.xlu0.b32.cont [2/16] 0.0, 128
        %1009 = vxpose.xlu0.b32.cont [3/16] 0.0, 128
        %1010 = vxpose.xlu0.b32.cont [4/16] 0.0, 128
        %1011 = vxpose.xlu0.b32.cont [5/16] 0.0, 128
        %1012 = vxpose.xlu0.b32.cont [6/16] 0.0, 128
        %1013 = vxpose.xlu0.b32.cont [7/16] 0.0, 128
        %1014 = vxpose.xlu0.b32.cont [8/16] 0.0, 128
        %1015 = vxpose.xlu0.b32.cont [9/16] 0.0, 128
        %1016 = vxpose.xlu0.b32.cont [10/16] 0.0, 128
        %1017 = vxpose.xlu0.b32.cont [11/16] 0.0, 128
        %1018 = vxpose.xlu0.b32.cont [12/16] 0.0, 128
        %1019 = vxpose.xlu0.b32.cont [13/16] 0.0, 128
        %1020 = vxpose.xlu0.b32.cont [14/16] 0.0, 128
        %1021 = vxpose.xlu0.b32.cont [15/16] 0.0, 128
        %1022 = vxpose.xlu0.b32.end [16/16] 0.0, 128
        %v1023 = vpop.trf.xlu0
        %v1024 = vpop.trf.xlu0
        %v1025 = vpop.trf.xlu0
        %v1026 = vpop.trf.xlu0
        %v1027 = vpop.trf.xlu0
        %v1028 = vpop.trf.xlu0
        %v1029 = vpop.trf.xlu0
        %v1030 = vpop.trf.xlu0
        %v1031 = vpop.trf.xlu0
        %v1032 = vpop.trf.xlu0
        %v1033 = vpop.trf.xlu0
        %v1034 = vpop.trf.xlu0
        %v1035 = vpop.trf.xlu0
        %v1036 = vpop.trf.xlu0
        %v1037 = vpop.trf.xlu0
        %v1038 = vpop.trf.xlu0
        %1039 = vxpose.xlu0.b32.start [1/16] %v507, 128
        %1040 = vxpose.xlu0.b32.cont [2/16] 0.0, 128
        %1041 = vxpose.xlu0.b32.cont [3/16] 0.0, 128
        %1042 = vxpose.xlu0.b32.cont [4/16] 0.0, 128
        %1043 = vxpose.xlu0.b32.cont [5/16] 0.0, 128
        %1044 = vxpose.xlu0.b32.cont [6/16] 0.0, 128
        %1045 = vxpose.xlu0.b32.cont [7/16] 0.0, 128
        %1046 = vxpose.xlu0.b32.cont [8/16] 0.0, 128
        %1047 = vxpose.xlu0.b32.cont [9/16] 0.0, 128
        %1048 = vxpose.xlu0.b32.cont [10/16] 0.0, 128
        %1049 = vxpose.xlu0.b32.cont [11/16] 0.0, 128
        %1050 = vxpose.xlu0.b32.cont [12/16] 0.0, 128
        %1051 = vxpose.xlu0.b32.cont [13/16] 0.0, 128
        %1052 = vxpose.xlu0.b32.cont [14/16] 0.0, 128
        %1053 = vxpose.xlu0.b32.cont [15/16] 0.0, 128
        %1054 = vxpose.xlu0.b32.end [16/16] 0.0, 128
        %v1055 = vpop.trf.xlu0
        %v1056 = vpop.trf.xlu0
        %v1057 = vpop.trf.xlu0
        %v1058 = vpop.trf.xlu0
        %v1059 = vpop.trf.xlu0
        %v1060 = vpop.trf.xlu0
        %v1061 = vpop.trf.xlu0
        %v1062 = vpop.trf.xlu0
        %v1063 = vpop.trf.xlu0
        %v1064 = vpop.trf.xlu0
        %v1065 = vpop.trf.xlu0
        %v1066 = vpop.trf.xlu0
        %v1067 = vpop.trf.xlu0
        %v1068 = vpop.trf.xlu0
        %v1069 = vpop.trf.xlu0
        %v1070 = vpop.trf.xlu0
        %1071 = vxpose.xlu0.b32.start [1/16] %v517, 128
        %1072 = vxpose.xlu0.b32.cont [2/16] 0.0, 128
        %1073 = vxpose.xlu0.b32.cont [3/16] 0.0, 128
        %1074 = vxpose.xlu0.b32.cont [4/16] 0.0, 128
        %1075 = vxpose.xlu0.b32.cont [5/16] 0.0, 128
        %1076 = vxpose.xlu0.b32.cont [6/16] 0.0, 128
        %1077 = vxpose.xlu0.b32.cont [7/16] 0.0, 128
        %1078 = vxpose.xlu0.b32.cont [8/16] 0.0, 128
        %1079 = vxpose.xlu0.b32.cont [9/16] 0.0, 128
        %1080 = vxpose.xlu0.b32.cont [10/16] 0.0, 128
        %1081 = vxpose.xlu0.b32.cont [11/16] 0.0, 128
        %1082 = vxpose.xlu0.b32.cont [12/16] 0.0, 128
        %1083 = vxpose.xlu0.b32.cont [13/16] 0.0, 128
        %1084 = vxpose.xlu0.b32.cont [14/16] 0.0, 128
        %1085 = vxpose.xlu0.b32.cont [15/16] 0.0, 128
        %1086 = vxpose.xlu0.b32.end [16/16] 0.0, 128
        %v1087 = vpop.trf.xlu0
        %v1088 = vpop.trf.xlu0
        %v1089 = vpop.trf.xlu0
        %v1090 = vpop.trf.xlu0
        %v1091 = vpop.trf.xlu0
        %v1092 = vpop.trf.xlu0
        %v1093 = vpop.trf.xlu0
        %v1094 = vpop.trf.xlu0
        %v1095 = vpop.trf.xlu0
        %v1096 = vpop.trf.xlu0
        %v1097 = vpop.trf.xlu0
        %v1098 = vpop.trf.xlu0
        %v1099 = vpop.trf.xlu0
        %v1100 = vpop.trf.xlu0
        %v1101 = vpop.trf.xlu0
        %v1102 = vpop.trf.xlu0
        %1103 = vxpose.xlu0.b32.start [1/16] %v514, 128
        %1104 = vxpose.xlu0.b32.cont [2/16] 0.0, 128
        %1105 = vxpose.xlu0.b32.cont [3/16] 0.0, 128
        %1106 = vxpose.xlu0.b32.cont [4/16] 0.0, 128
        %1107 = vxpose.xlu0.b32.cont [5/16] 0.0, 128
        %1108 = vxpose.xlu0.b32.cont [6/16] 0.0, 128
        %1109 = vxpose.xlu0.b32.cont [7/16] 0.0, 128
        %1110 = vxpose.xlu0.b32.cont [8/16] 0.0, 128
        %1111 = vxpose.xlu0.b32.cont [9/16] 0.0, 128
        %1112 = vxpose.xlu0.b32.cont [10/16] 0.0, 128
        %1113 = vxpose.xlu0.b32.cont [11/16] 0.0, 128
        %1114 = vxpose.xlu0.b32.cont [12/16] 0.0, 128
        %1115 = vxpose.xlu0.b32.cont [13/16] 0.0, 128
        %1116 = vxpose.xlu0.b32.cont [14/16] 0.0, 128
        %1117 = vxpose.xlu0.b32.cont [15/16] 0.0, 128
        %1118 = vxpose.xlu0.b32.end [16/16] 0.0, 128
        %v1119 = vpop.trf.xlu0
        %v1120 = vpop.trf.xlu0
        %v1121 = vpop.trf.xlu0
        %v1122 = vpop.trf.xlu0
        %v1123 = vpop.trf.xlu0
        %v1124 = vpop.trf.xlu0
        %v1125 = vpop.trf.xlu0
        %v1126 = vpop.trf.xlu0
        %v1127 = vpop.trf.xlu0
        %v1128 = vpop.trf.xlu0
        %v1129 = vpop.trf.xlu0
        %v1130 = vpop.trf.xlu0
        %v1131 = vpop.trf.xlu0
        %v1132 = vpop.trf.xlu0
        %v1133 = vpop.trf.xlu0
        %v1134 = vpop.trf.xlu0
        %1135 = vxpose.xlu0.b32.start [1/16] %v518, 128
        %1136 = vxpose.xlu0.b32.cont [2/16] 0.0, 128
        %1137 = vxpose.xlu0.b32.cont [3/16] 0.0, 128
        %1138 = vxpose.xlu0.b32.cont [4/16] 0.0, 128
        %1139 = vxpose.xlu0.b32.cont [5/16] 0.0, 128
        %1140 = vxpose.xlu0.b32.cont [6/16] 0.0, 128
        %1141 = vxpose.xlu0.b32.cont [7/16] 0.0, 128
        %1142 = vxpose.xlu0.b32.cont [8/16] 0.0, 128
        %1143 = vxpose.xlu0.b32.cont [9/16] 0.0, 128
        %1144 = vxpose.xlu0.b32.cont [10/16] 0.0, 128
        %1145 = vxpose.xlu0.b32.cont [11/16] 0.0, 128
        %1146 = vxpose.xlu0.b32.cont [12/16] 0.0, 128
        %1147 = vxpose.xlu0.b32.cont [13/16] 0.0, 128
        %1148 = vxpose.xlu0.b32.cont [14/16] 0.0, 128
        %1149 = vxpose.xlu0.b32.cont [15/16] 0.0, 128
        %1150 = vxpose.xlu0.b32.end [16/16] 0.0, 128
        %v1151 = vpop.trf.xlu0
        %v1152 = vpop.trf.xlu0
        %v1153 = vpop.trf.xlu0
        %v1154 = vpop.trf.xlu0
        %v1155 = vpop.trf.xlu0
        %v1156 = vpop.trf.xlu0
        %v1157 = vpop.trf.xlu0
        %v1158 = vpop.trf.xlu0
        %v1159 = vpop.trf.xlu0
        %v1160 = vpop.trf.xlu0
        %v1161 = vpop.trf.xlu0
        %v1162 = vpop.trf.xlu0
        %v1163 = vpop.trf.xlu0
        %v1164 = vpop.trf.xlu0
        %v1165 = vpop.trf.xlu0
        %v1166 = vpop.trf.xlu0
        %1167 = vxpose.xlu0.b32.start [1/16] %v559, 128
        %1168 = vxpose.xlu0.b32.cont [2/16] 0.0, 128
        %1169 = vxpose.xlu0.b32.cont [3/16] 0.0, 128
        %1170 = vxpose.xlu0.b32.cont [4/16] 0.0, 128
        %1171 = vxpose.xlu0.b32.cont [5/16] 0.0, 128
        %1172 = vxpose.xlu0.b32.cont [6/16] 0.0, 128
        %1173 = vxpose.xlu0.b32.cont [7/16] 0.0, 128
        %1174 = vxpose.xlu0.b32.cont [8/16] 0.0, 128
        %1175 = vxpose.xlu0.b32.cont [9/16] 0.0, 128
        %1176 = vxpose.xlu0.b32.cont [10/16] 0.0, 128
        %1177 = vxpose.xlu0.b32.cont [11/16] 0.0, 128
        %1178 = vxpose.xlu0.b32.cont [12/16] 0.0, 128
        %1179 = vxpose.xlu0.b32.cont [13/16] 0.0, 128
        %1180 = vxpose.xlu0.b32.cont [14/16] 0.0, 128
        %1181 = vxpose.xlu0.b32.cont [15/16] 0.0, 128
        %1182 = vxpose.xlu0.b32.end [16/16] 0.0, 128
        %v1183 = vpop.trf.xlu0
        %v1184 = vpop.trf.xlu0
        %v1185 = vpop.trf.xlu0
        %v1186 = vpop.trf.xlu0
        %v1187 = vpop.trf.xlu0
        %v1188 = vpop.trf.xlu0
        %v1189 = vpop.trf.xlu0
        %v1190 = vpop.trf.xlu0
        %v1191 = vpop.trf.xlu0
        %v1192 = vpop.trf.xlu0
        %v1193 = vpop.trf.xlu0
        %v1194 = vpop.trf.xlu0
        %v1195 = vpop.trf.xlu0
        %v1196 = vpop.trf.xlu0
        %v1197 = vpop.trf.xlu0
        %v1198 = vpop.trf.xlu0
        %1199 = vxpose.xlu0.b32.start [1/16] %v583, 128
        %1200 = vxpose.xlu0.b32.cont [2/16] 0.0, 128
        %1201 = vxpose.xlu0.b32.cont [3/16] 0.0, 128
        %1202 = vxpose.xlu0.b32.cont [4/16] 0.0, 128
        %1203 = vxpose.xlu0.b32.cont [5/16] 0.0, 128
        %1204 = vxpose.xlu0.b32.cont [6/16] 0.0, 128
        %1205 = vxpose.xlu0.b32.cont [7/16] 0.0, 128
        %1206 = vxpose.xlu0.b32.cont [8/16] 0.0, 128
        %1207 = vxpose.xlu0.b32.cont [9/16] 0.0, 128
        %1208 = vxpose.xlu0.b32.cont [10/16] 0.0, 128
        %1209 = vxpose.xlu0.b32.cont [11/16] 0.0, 128
        %1210 = vxpose.xlu0.b32.cont [12/16] 0.0, 128
        %1211 = vxpose.xlu0.b32.cont [13/16] 0.0, 128
        %1212 = vxpose.xlu0.b32.cont [14/16] 0.0, 128
        %1213 = vxpose.xlu0.b32.cont [15/16] 0.0, 128
        %1214 = vxpose.xlu0.b32.end [16/16] 0.0, 128
        %v1215 = vpop.trf.xlu0
        %v1216 = vpop.trf.xlu0
        %v1217 = vpop.trf.xlu0
        %v1218 = vpop.trf.xlu0
        %v1219 = vpop.trf.xlu0
        %v1220 = vpop.trf.xlu0
        %v1221 = vpop.trf.xlu0
        %v1222 = vpop.trf.xlu0
        %v1223 = vpop.trf.xlu0
        %v1224 = vpop.trf.xlu0
        %v1225 = vpop.trf.xlu0
        %v1226 = vpop.trf.xlu0
        %v1227 = vpop.trf.xlu0
        %v1228 = vpop.trf.xlu0
        %v1229 = vpop.trf.xlu0
        %v1230 = vpop.trf.xlu0
        %1231 = vxpose.xlu0.b32.start [1/16] %v566, 128
        %1232 = vxpose.xlu0.b32.cont [2/16] 0.0, 128
        %1233 = vxpose.xlu0.b32.cont [3/16] 0.0, 128
        %1234 = vxpose.xlu0.b32.cont [4/16] 0.0, 128
        %1235 = vxpose.xlu0.b32.cont [5/16] 0.0, 128
        %1236 = vxpose.xlu0.b32.cont [6/16] 0.0, 128
        %1237 = vxpose.xlu0.b32.cont [7/16] 0.0, 128
        %1238 = vxpose.xlu0.b32.cont [8/16] 0.0, 128
        %1239 = vxpose.xlu0.b32.cont [9/16] 0.0, 128
        %1240 = vxpose.xlu0.b32.cont [10/16] 0.0, 128
        %1241 = vxpose.xlu0.b32.cont [11/16] 0.0, 128
        %1242 = vxpose.xlu0.b32.cont [12/16] 0.0, 128
        %1243 = vxpose.xlu0.b32.cont [13/16] 0.0, 128
        %1244 = vxpose.xlu0.b32.cont [14/16] 0.0, 128
        %1245 = vxpose.xlu0.b32.cont [15/16] 0.0, 128
        %1246 = vxpose.xlu0.b32.end [16/16] 0.0, 128
        %v1247 = vpop.trf.xlu0
        %v1248 = vpop.trf.xlu0
        %v1249 = vpop.trf.xlu0
        %v1250 = vpop.trf.xlu0
        %v1251 = vpop.trf.xlu0
        %v1252 = vpop.trf.xlu0
        %v1253 = vpop.trf.xlu0
        %v1254 = vpop.trf.xlu0
        %v1255 = vpop.trf.xlu0
        %v1256 = vpop.trf.xlu0
        %v1257 = vpop.trf.xlu0
        %v1258 = vpop.trf.xlu0
        %v1259 = vpop.trf.xlu0
        %v1260 = vpop.trf.xlu0
        %v1261 = vpop.trf.xlu0
        %v1262 = vpop.trf.xlu0
        %1263 = vxpose.xlu0.b32.start [1/16] %v584, 128
        %1264 = vxpose.xlu0.b32.cont [2/16] 0.0, 128
        %1265 = vxpose.xlu0.b32.cont [3/16] 0.0, 128
        %1266 = vxpose.xlu0.b32.cont [4/16] 0.0, 128
        %1267 = vxpose.xlu0.b32.cont [5/16] 0.0, 128
        %1268 = vxpose.xlu0.b32.cont [6/16] 0.0, 128
        %1269 = vxpose.xlu0.b32.cont [7/16] 0.0, 128
        %1270 = vxpose.xlu0.b32.cont [8/16] 0.0, 128
        %1271 = vxpose.xlu0.b32.cont [9/16] 0.0, 128
        %1272 = vxpose.xlu0.b32.cont [10/16] 0.0, 128
        %1273 = vxpose.xlu0.b32.cont [11/16] 0.0, 128
        %1274 = vxpose.xlu0.b32.cont [12/16] 0.0, 128
        %1275 = vxpose.xlu0.b32.cont [13/16] 0.0, 128
        %1276 = vxpose.xlu0.b32.cont [14/16] 0.0, 128
        %1277 = vxpose.xlu0.b32.cont [15/16] 0.0, 128
        %1278 = vxpose.xlu0.b32.end [16/16] 0.0, 128
        %v1279 = vpop.trf.xlu0
        %v1280 = vpop.trf.xlu0
        %v1281 = vpop.trf.xlu0
        %v1282 = vpop.trf.xlu0
        %v1283 = vpop.trf.xlu0
        %v1284 = vpop.trf.xlu0
        %v1285 = vpop.trf.xlu0
        %v1286 = vpop.trf.xlu0
        %v1287 = vpop.trf.xlu0
        %v1288 = vpop.trf.xlu0
        %v1289 = vpop.trf.xlu0
        %v1290 = vpop.trf.xlu0
        %v1291 = vpop.trf.xlu0
        %v1292 = vpop.trf.xlu0
        %v1293 = vpop.trf.xlu0
        %v1294 = vpop.trf.xlu0
        %1295 = vxpose.xlu0.b32.start [1/16] %v575, 128
        %1296 = vxpose.xlu0.b32.cont [2/16] 0.0, 128
        %1297 = vxpose.xlu0.b32.cont [3/16] 0.0, 128
        %1298 = vxpose.xlu0.b32.cont [4/16] 0.0, 128
        %1299 = vxpose.xlu0.b32.cont [5/16] 0.0, 128
        %1300 = vxpose.xlu0.b32.cont [6/16] 0.0, 128
        %1301 = vxpose.xlu0.b32.cont [7/16] 0.0, 128
        %1302 = vxpose.xlu0.b32.cont [8/16] 0.0, 128
        %1303 = vxpose.xlu0.b32.cont [9/16] 0.0, 128
        %1304 = vxpose.xlu0.b32.cont [10/16] 0.0, 128
        %1305 = vxpose.xlu0.b32.cont [11/16] 0.0, 128
        %1306 = vxpose.xlu0.b32.cont [12/16] 0.0, 128
        %1307 = vxpose.xlu0.b32.cont [13/16] 0.0, 128
        %1308 = vxpose.xlu0.b32.cont [14/16] 0.0, 128
        %1309 = vxpose.xlu0.b32.cont [15/16] 0.0, 128
        %1310 = vxpose.xlu0.b32.end [16/16] 0.0, 128
        %v1311 = vpop.trf.xlu0
        %v1312 = vpop.trf.xlu0
        %v1313 = vpop.trf.xlu0
        %v1314 = vpop.trf.xlu0
        %v1315 = vpop.trf.xlu0
        %v1316 = vpop.trf.xlu0
        %v1317 = vpop.trf.xlu0
        %v1318 = vpop.trf.xlu0
        %v1319 = vpop.trf.xlu0
        %v1320 = vpop.trf.xlu0
        %v1321 = vpop.trf.xlu0
        %v1322 = vpop.trf.xlu0
        %v1323 = vpop.trf.xlu0
        %v1324 = vpop.trf.xlu0
        %v1325 = vpop.trf.xlu0
        %v1326 = vpop.trf.xlu0
        %1327 = vxpose.xlu0.b32.start [1/16] %v585, 128
        %1328 = vxpose.xlu0.b32.cont [2/16] 0.0, 128
        %1329 = vxpose.xlu0.b32.cont [3/16] 0.0, 128
        %1330 = vxpose.xlu0.b32.cont [4/16] 0.0, 128
        %1331 = vxpose.xlu0.b32.cont [5/16] 0.0, 128
        %1332 = vxpose.xlu0.b32.cont [6/16] 0.0, 128
        %1333 = vxpose.xlu0.b32.cont [7/16] 0.0, 128
        %1334 = vxpose.xlu0.b32.cont [8/16] 0.0, 128
        %1335 = vxpose.xlu0.b32.cont [9/16] 0.0, 128
        %1336 = vxpose.xlu0.b32.cont [10/16] 0.0, 128
        %1337 = vxpose.xlu0.b32.cont [11/16] 0.0, 128
        %1338 = vxpose.xlu0.b32.cont [12/16] 0.0, 128
        %1339 = vxpose.xlu0.b32.cont [13/16] 0.0, 128
        %1340 = vxpose.xlu0.b32.cont [14/16] 0.0, 128
        %1341 = vxpose.xlu0.b32.cont [15/16] 0.0, 128
        %1342 = vxpose.xlu0.b32.end [16/16] 0.0, 128
        %v1343 = vpop.trf.xlu0
        %v1344 = vpop.trf.xlu0
        %v1345 = vpop.trf.xlu0
        %v1346 = vpop.trf.xlu0
        %v1347 = vpop.trf.xlu0
        %v1348 = vpop.trf.xlu0
        %v1349 = vpop.trf.xlu0
        %v1350 = vpop.trf.xlu0
        %v1351 = vpop.trf.xlu0
        %v1352 = vpop.trf.xlu0
        %v1353 = vpop.trf.xlu0
        %v1354 = vpop.trf.xlu0
        %v1355 = vpop.trf.xlu0
        %v1356 = vpop.trf.xlu0
        %v1357 = vpop.trf.xlu0
        %v1358 = vpop.trf.xlu0
        %1359 = vxpose.xlu0.b32.start [1/16] %v582, 128
        %1360 = vxpose.xlu0.b32.cont [2/16] 0.0, 128
        %1361 = vxpose.xlu0.b32.cont [3/16] 0.0, 128
        %1362 = vxpose.xlu0.b32.cont [4/16] 0.0, 128
        %1363 = vxpose.xlu0.b32.cont [5/16] 0.0, 128
        %1364 = vxpose.xlu0.b32.cont [6/16] 0.0, 128
        %1365 = vxpose.xlu0.b32.cont [7/16] 0.0, 128
        %1366 = vxpose.xlu0.b32.cont [8/16] 0.0, 128
        %1367 = vxpose.xlu0.b32.cont [9/16] 0.0, 128
        %1368 = vxpose.xlu0.b32.cont [10/16] 0.0, 128
        %1369 = vxpose.xlu0.b32.cont [11/16] 0.0, 128
        %1370 = vxpose.xlu0.b32.cont [12/16] 0.0, 128
        %1371 = vxpose.xlu0.b32.cont [13/16] 0.0, 128
        %1372 = vxpose.xlu0.b32.cont [14/16] 0.0, 128
        %1373 = vxpose.xlu0.b32.cont [15/16] 0.0, 128
        %1374 = vxpose.xlu0.b32.end [16/16] 0.0, 128
        %v1375 = vpop.trf.xlu0
        %v1376 = vpop.trf.xlu0
        %v1377 = vpop.trf.xlu0
        %v1378 = vpop.trf.xlu0
        %v1379 = vpop.trf.xlu0
        %v1380 = vpop.trf.xlu0
        %v1381 = vpop.trf.xlu0
        %v1382 = vpop.trf.xlu0
        %v1383 = vpop.trf.xlu0
        %v1384 = vpop.trf.xlu0
        %v1385 = vpop.trf.xlu0
        %v1386 = vpop.trf.xlu0
        %v1387 = vpop.trf.xlu0
        %v1388 = vpop.trf.xlu0
        %v1389 = vpop.trf.xlu0
        %v1390 = vpop.trf.xlu0
        %1391 = vxpose.xlu0.b32.start [1/16] %v586, 128
        %1392 = vxpose.xlu0.b32.cont [2/16] 0.0, 128
        %1393 = vxpose.xlu0.b32.cont [3/16] 0.0, 128
        %1394 = vxpose.xlu0.b32.cont [4/16] 0.0, 128
        %1395 = vxpose.xlu0.b32.cont [5/16] 0.0, 128
        %1396 = vxpose.xlu0.b32.cont [6/16] 0.0, 128
        %1397 = vxpose.xlu0.b32.cont [7/16] 0.0, 128
        %1398 = vxpose.xlu0.b32.cont [8/16] 0.0, 128
        %1399 = vxpose.xlu0.b32.cont [9/16] 0.0, 128
        %1400 = vxpose.xlu0.b32.cont [10/16] 0.0, 128
        %1401 = vxpose.xlu0.b32.cont [11/16] 0.0, 128
        %1402 = vxpose.xlu0.b32.cont [12/16] 0.0, 128
        %1403 = vxpose.xlu0.b32.cont [13/16] 0.0, 128
        %1404 = vxpose.xlu0.b32.cont [14/16] 0.0, 128
        %1405 = vxpose.xlu0.b32.cont [15/16] 0.0, 128
        %1406 = vxpose.xlu0.b32.end [16/16] 0.0, 128
        %v1407 = vpop.trf.xlu0
        %v1408 = vpop.trf.xlu0
        %v1409 = vpop.trf.xlu0
        %v1410 = vpop.trf.xlu0
        %v1411 = vpop.trf.xlu0
        %v1412 = vpop.trf.xlu0
        %v1413 = vpop.trf.xlu0
        %v1414 = vpop.trf.xlu0
        %v1415 = vpop.trf.xlu0
        %v1416 = vpop.trf.xlu0
        %v1417 = vpop.trf.xlu0
        %v1418 = vpop.trf.xlu0
        %v1419 = vpop.trf.xlu0
        %v1420 = vpop.trf.xlu0
        %v1421 = vpop.trf.xlu0
        %v1422 = vpop.trf.xlu0
        %1423 = vxpose.xlu0.b32.start [1/16] %v627, 128
        %1424 = vxpose.xlu0.b32.cont [2/16] 0.0, 128
        %1425 = vxpose.xlu0.b32.cont [3/16] 0.0, 128
        %1426 = vxpose.xlu0.b32.cont [4/16] 0.0, 128
        %1427 = vxpose.xlu0.b32.cont [5/16] 0.0, 128
        %1428 = vxpose.xlu0.b32.cont [6/16] 0.0, 128
        %1429 = vxpose.xlu0.b32.cont [7/16] 0.0, 128
        %1430 = vxpose.xlu0.b32.cont [8/16] 0.0, 128
        %1431 = vxpose.xlu0.b32.cont [9/16] 0.0, 128
        %1432 = vxpose.xlu0.b32.cont [10/16] 0.0, 128
        %1433 = vxpose.xlu0.b32.cont [11/16] 0.0, 128
        %1434 = vxpose.xlu0.b32.cont [12/16] 0.0, 128
        %1435 = vxpose.xlu0.b32.cont [13/16] 0.0, 128
        %1436 = vxpose.xlu0.b32.cont [14/16] 0.0, 128
        %1437 = vxpose.xlu0.b32.cont [15/16] 0.0, 128
        %1438 = vxpose.xlu0.b32.end [16/16] 0.0, 128
        %v1439 = vpop.trf.xlu0
        %v1440 = vpop.trf.xlu0
        %v1441 = vpop.trf.xlu0
        %v1442 = vpop.trf.xlu0
        %v1443 = vpop.trf.xlu0
        %v1444 = vpop.trf.xlu0
        %v1445 = vpop.trf.xlu0
        %v1446 = vpop.trf.xlu0
        %v1447 = vpop.trf.xlu0
        %v1448 = vpop.trf.xlu0
        %v1449 = vpop.trf.xlu0
        %v1450 = vpop.trf.xlu0
        %v1451 = vpop.trf.xlu0
        %v1452 = vpop.trf.xlu0
        %v1453 = vpop.trf.xlu0
        %v1454 = vpop.trf.xlu0
        %1455 = vxpose.xlu0.b32.start [1/16] %v651, 128
        %1456 = vxpose.xlu0.b32.cont [2/16] 0.0, 128
        %1457 = vxpose.xlu0.b32.cont [3/16] 0.0, 128
        %1458 = vxpose.xlu0.b32.cont [4/16] 0.0, 128
        %1459 = vxpose.xlu0.b32.cont [5/16] 0.0, 128
        %1460 = vxpose.xlu0.b32.cont [6/16] 0.0, 128
        %1461 = vxpose.xlu0.b32.cont [7/16] 0.0, 128
        %1462 = vxpose.xlu0.b32.cont [8/16] 0.0, 128
        %1463 = vxpose.xlu0.b32.cont [9/16] 0.0, 128
        %1464 = vxpose.xlu0.b32.cont [10/16] 0.0, 128
        %1465 = vxpose.xlu0.b32.cont [11/16] 0.0, 128
        %1466 = vxpose.xlu0.b32.cont [12/16] 0.0, 128
        %1467 = vxpose.xlu0.b32.cont [13/16] 0.0, 128
        %1468 = vxpose.xlu0.b32.cont [14/16] 0.0, 128
        %1469 = vxpose.xlu0.b32.cont [15/16] 0.0, 128
        %1470 = vxpose.xlu0.b32.end [16/16] 0.0, 128
        %v1471 = vpop.trf.xlu0
        %v1472 = vpop.trf.xlu0
        %v1473 = vpop.trf.xlu0
        %v1474 = vpop.trf.xlu0
        %v1475 = vpop.trf.xlu0
        %v1476 = vpop.trf.xlu0
        %v1477 = vpop.trf.xlu0
        %v1478 = vpop.trf.xlu0
        %v1479 = vpop.trf.xlu0
        %v1480 = vpop.trf.xlu0
        %v1481 = vpop.trf.xlu0
        %v1482 = vpop.trf.xlu0
        %v1483 = vpop.trf.xlu0
        %v1484 = vpop.trf.xlu0
        %v1485 = vpop.trf.xlu0
        %v1486 = vpop.trf.xlu0
        %1487 = vxpose.xlu0.b32.start [1/16] %v634, 128
        %1488 = vxpose.xlu0.b32.cont [2/16] 0.0, 128
        %1489 = vxpose.xlu0.b32.cont [3/16] 0.0, 128
        %1490 = vxpose.xlu0.b32.cont [4/16] 0.0, 128
        %1491 = vxpose.xlu0.b32.cont [5/16] 0.0, 128
        %1492 = vxpose.xlu0.b32.cont [6/16] 0.0, 128
        %1493 = vxpose.xlu0.b32.cont [7/16] 0.0, 128
        %1494 = vxpose.xlu0.b32.cont [8/16] 0.0, 128
        %1495 = vxpose.xlu0.b32.cont [9/16] 0.0, 128
        %1496 = vxpose.xlu0.b32.cont [10/16] 0.0, 128
        %1497 = vxpose.xlu0.b32.cont [11/16] 0.0, 128
        %1498 = vxpose.xlu0.b32.cont [12/16] 0.0, 128
        %1499 = vxpose.xlu0.b32.cont [13/16] 0.0, 128
        %1500 = vxpose.xlu0.b32.cont [14/16] 0.0, 128
        %1501 = vxpose.xlu0.b32.cont [15/16] 0.0, 128
        %1502 = vxpose.xlu0.b32.end [16/16] 0.0, 128
        %v1503 = vpop.trf.xlu0
        %v1504 = vpop.trf.xlu0
        %v1505 = vpop.trf.xlu0
        %v1506 = vpop.trf.xlu0
        %v1507 = vpop.trf.xlu0
        %v1508 = vpop.trf.xlu0
        %v1509 = vpop.trf.xlu0
        %v1510 = vpop.trf.xlu0
        %v1511 = vpop.trf.xlu0
        %v1512 = vpop.trf.xlu0
        %v1513 = vpop.trf.xlu0
        %v1514 = vpop.trf.xlu0
        %v1515 = vpop.trf.xlu0
        %v1516 = vpop.trf.xlu0
        %v1517 = vpop.trf.xlu0
        %v1518 = vpop.trf.xlu0
        %1519 = vxpose.xlu0.b32.start [1/16] %v652, 128
        %1520 = vxpose.xlu0.b32.cont [2/16] 0.0, 128
        %1521 = vxpose.xlu0.b32.cont [3/16] 0.0, 128
        %1522 = vxpose.xlu0.b32.cont [4/16] 0.0, 128
        %1523 = vxpose.xlu0.b32.cont [5/16] 0.0, 128
        %1524 = vxpose.xlu0.b32.cont [6/16] 0.0, 128
        %1525 = vxpose.xlu0.b32.cont [7/16] 0.0, 128
        %1526 = vxpose.xlu0.b32.cont [8/16] 0.0, 128
        %1527 = vxpose.xlu0.b32.cont [9/16] 0.0, 128
        %1528 = vxpose.xlu0.b32.cont [10/16] 0.0, 128
        %1529 = vxpose.xlu0.b32.cont [11/16] 0.0, 128
        %1530 = vxpose.xlu0.b32.cont [12/16] 0.0, 128
        %1531 = vxpose.xlu0.b32.cont [13/16] 0.0, 128
        %1532 = vxpose.xlu0.b32.cont [14/16] 0.0, 128
        %1533 = vxpose.xlu0.b32.cont [15/16] 0.0, 128
        %1534 = vxpose.xlu0.b32.end [16/16] 0.0, 128
        %v1535 = vpop.trf.xlu0
        %v1536 = vpop.trf.xlu0
        %v1537 = vpop.trf.xlu0
        %v1538 = vpop.trf.xlu0
        %v1539 = vpop.trf.xlu0
        %v1540 = vpop.trf.xlu0
        %v1541 = vpop.trf.xlu0
        %v1542 = vpop.trf.xlu0
        %v1543 = vpop.trf.xlu0
        %v1544 = vpop.trf.xlu0
        %v1545 = vpop.trf.xlu0
        %v1546 = vpop.trf.xlu0
        %v1547 = vpop.trf.xlu0
        %v1548 = vpop.trf.xlu0
        %v1549 = vpop.trf.xlu0
        %v1550 = vpop.trf.xlu0
        %1551 = vxpose.xlu0.b32.start [1/16] %v643, 128
        %1552 = vxpose.xlu0.b32.cont [2/16] 0.0, 128
        %1553 = vxpose.xlu0.b32.cont [3/16] 0.0, 128
        %1554 = vxpose.xlu0.b32.cont [4/16] 0.0, 128
        %1555 = vxpose.xlu0.b32.cont [5/16] 0.0, 128
        %1556 = vxpose.xlu0.b32.cont [6/16] 0.0, 128
        %1557 = vxpose.xlu0.b32.cont [7/16] 0.0, 128
        %1558 = vxpose.xlu0.b32.cont [8/16] 0.0, 128
        %1559 = vxpose.xlu0.b32.cont [9/16] 0.0, 128
        %1560 = vxpose.xlu0.b32.cont [10/16] 0.0, 128
        %1561 = vxpose.xlu0.b32.cont [11/16] 0.0, 128
        %1562 = vxpose.xlu0.b32.cont [12/16] 0.0, 128
        %1563 = vxpose.xlu0.b32.cont [13/16] 0.0, 128
        %1564 = vxpose.xlu0.b32.cont [14/16] 0.0, 128
        %1565 = vxpose.xlu0.b32.cont [15/16] 0.0, 128
        %1566 = vxpose.xlu0.b32.end [16/16] 0.0, 128
        %v1567 = vpop.trf.xlu0
        %v1568 = vpop.trf.xlu0
        %v1569 = vpop.trf.xlu0
        %v1570 = vpop.trf.xlu0
        %v1571 = vpop.trf.xlu0
        %v1572 = vpop.trf.xlu0
        %v1573 = vpop.trf.xlu0
        %v1574 = vpop.trf.xlu0
        %v1575 = vpop.trf.xlu0
        %v1576 = vpop.trf.xlu0
        %v1577 = vpop.trf.xlu0
        %v1578 = vpop.trf.xlu0
        %v1579 = vpop.trf.xlu0
        %v1580 = vpop.trf.xlu0
        %v1581 = vpop.trf.xlu0
        %v1582 = vpop.trf.xlu0
        %1583 = vxpose.xlu0.b32.start [1/16] %v653, 128
        %1584 = vxpose.xlu0.b32.cont [2/16] 0.0, 128
        %1585 = vxpose.xlu0.b32.cont [3/16] 0.0, 128
        %1586 = vxpose.xlu0.b32.cont [4/16] 0.0, 128
        %1587 = vxpose.xlu0.b32.cont [5/16] 0.0, 128
        %1588 = vxpose.xlu0.b32.cont [6/16] 0.0, 128
        %1589 = vxpose.xlu0.b32.cont [7/16] 0.0, 128
        %1590 = vxpose.xlu0.b32.cont [8/16] 0.0, 128
        %1591 = vxpose.xlu0.b32.cont [9/16] 0.0, 128
        %1592 = vxpose.xlu0.b32.cont [10/16] 0.0, 128
        %1593 = vxpose.xlu0.b32.cont [11/16] 0.0, 128
        %1594 = vxpose.xlu0.b32.cont [12/16] 0.0, 128
        %1595 = vxpose.xlu0.b32.cont [13/16] 0.0, 128
        %1596 = vxpose.xlu0.b32.cont [14/16] 0.0, 128
        %1597 = vxpose.xlu0.b32.cont [15/16] 0.0, 128
        %1598 = vxpose.xlu0.b32.end [16/16] 0.0, 128
        %v1599 = vpop.trf.xlu0
        %v1600 = vpop.trf.xlu0
        %v1601 = vpop.trf.xlu0
        %v1602 = vpop.trf.xlu0
        %v1603 = vpop.trf.xlu0
        %v1604 = vpop.trf.xlu0
        %v1605 = vpop.trf.xlu0
        %v1606 = vpop.trf.xlu0
        %v1607 = vpop.trf.xlu0
        %v1608 = vpop.trf.xlu0
        %v1609 = vpop.trf.xlu0
        %v1610 = vpop.trf.xlu0
        %v1611 = vpop.trf.xlu0
        %v1612 = vpop.trf.xlu0
        %v1613 = vpop.trf.xlu0
        %v1614 = vpop.trf.xlu0
        %1615 = vxpose.xlu0.b32.start [1/16] %v650, 128
        %1616 = vxpose.xlu0.b32.cont [2/16] 0.0, 128
        %1617 = vxpose.xlu0.b32.cont [3/16] 0.0, 128
        %1618 = vxpose.xlu0.b32.cont [4/16] 0.0, 128
        %1619 = vxpose.xlu0.b32.cont [5/16] 0.0, 128
        %1620 = vxpose.xlu0.b32.cont [6/16] 0.0, 128
        %1621 = vxpose.xlu0.b32.cont [7/16] 0.0, 128
        %1622 = vxpose.xlu0.b32.cont [8/16] 0.0, 128
        %1623 = vxpose.xlu0.b32.cont [9/16] 0.0, 128
        %1624 = vxpose.xlu0.b32.cont [10/16] 0.0, 128
        %1625 = vxpose.xlu0.b32.cont [11/16] 0.0, 128
        %1626 = vxpose.xlu0.b32.cont [12/16] 0.0, 128
        %1627 = vxpose.xlu0.b32.cont [13/16] 0.0, 128
        %1628 = vxpose.xlu0.b32.cont [14/16] 0.0, 128
        %1629 = vxpose.xlu0.b32.cont [15/16] 0.0, 128
        %1630 = vxpose.xlu0.b32.end [16/16] 0.0, 128
        %v1631 = vpop.trf.xlu0
        %v1632 = vpop.trf.xlu0
        %v1633 = vpop.trf.xlu0
        %v1634 = vpop.trf.xlu0
        %v1635 = vpop.trf.xlu0
        %v1636 = vpop.trf.xlu0
        %v1637 = vpop.trf.xlu0
        %v1638 = vpop.trf.xlu0
        %v1639 = vpop.trf.xlu0
        %v1640 = vpop.trf.xlu0
        %v1641 = vpop.trf.xlu0
        %v1642 = vpop.trf.xlu0
        %v1643 = vpop.trf.xlu0
        %v1644 = vpop.trf.xlu0
        %v1645 = vpop.trf.xlu0
        %v1646 = vpop.trf.xlu0
        %1647 = vxpose.xlu0.b32.start [1/16] %v654, 128
        %1648 = vxpose.xlu0.b32.cont [2/16] 0.0, 128
        %1649 = vxpose.xlu0.b32.cont [3/16] 0.0, 128
        %1650 = vxpose.xlu0.b32.cont [4/16] 0.0, 128
        %1651 = vxpose.xlu0.b32.cont [5/16] 0.0, 128
        %1652 = vxpose.xlu0.b32.cont [6/16] 0.0, 128
        %1653 = vxpose.xlu0.b32.cont [7/16] 0.0, 128
        %1654 = vxpose.xlu0.b32.cont [8/16] 0.0, 128
        %1655 = vxpose.xlu0.b32.cont [9/16] 0.0, 128
        %1656 = vxpose.xlu0.b32.cont [10/16] 0.0, 128
        %1657 = vxpose.xlu0.b32.cont [11/16] 0.0, 128
        %1658 = vxpose.xlu0.b32.cont [12/16] 0.0, 128
        %1659 = vxpose.xlu0.b32.cont [13/16] 0.0, 128
        %1660 = vxpose.xlu0.b32.cont [14/16] 0.0, 128
        %1661 = vxpose.xlu0.b32.cont [15/16] 0.0, 128
        %1662 = vxpose.xlu0.b32.end [16/16] 0.0, 128
        %v1663 = vpop.trf.xlu0
        %v1664 = vpop.trf.xlu0
        %v1665 = vpop.trf.xlu0
        %v1666 = vpop.trf.xlu0
        %v1667 = vpop.trf.xlu0
        %v1668 = vpop.trf.xlu0
        %v1669 = vpop.trf.xlu0
        %v1670 = vpop.trf.xlu0
        %v1671 = vpop.trf.xlu0
        %v1672 = vpop.trf.xlu0
        %v1673 = vpop.trf.xlu0
        %v1674 = vpop.trf.xlu0
        %v1675 = vpop.trf.xlu0
        %v1676 = vpop.trf.xlu0
        %v1677 = vpop.trf.xlu0
        %v1678 = vpop.trf.xlu0
        %v1679 = vcombine.low %v671, %v735
        %v1680 = vcombine.high %v671, %v735
        %v1682 = vunpack.c.l.s4 1983009808
        %v1683 = vunpack.c.0.s8 %v1682
        %v1684 = vlaneseq
        %v1685 = vshrl.u32 %v1684, 7
        %v1686 = vsub.s32 %v1683, %v1685
        %v1687 = vrot.slane %v1679, %v1686
        %v1689 = vunpack.c.l.s4 1983009808
        %v1690 = vunpack.c.0.s8 %v1689
        %v1691 = vlaneseq
        %v1692 = vshrl.u32 %v1691, 7
        %v1693 = vsub.s32 %v1690, %v1692
        %v1694 = vrot.slane %v1680, %v1693
        %v1695 = vcombine.low %v703, %v767
        %v1696 = vcombine.high %v703, %v767
        %v1698 = vunpack.c.l.s4 1983009808
        %v1699 = vunpack.c.0.s8 %v1698
        %v1700 = vlaneseq
        %v1701 = vshrl.u32 %v1700, 7
        %v1702 = vsub.s32 %v1699, %v1701
        %v1703 = vrot.slane %v1695, %v1702
        %v1705 = vunpack.c.l.s4 1983009808
        %v1706 = vunpack.c.0.s8 %v1705
        %v1707 = vlaneseq
        %v1708 = vshrl.u32 %v1707, 7
        %v1709 = vsub.s32 %v1706, %v1708
        %v1710 = vrot.slane %v1696, %v1709
        %v1711 = vcombine.low %v799, %v863
        %v1712 = vcombine.high %v799, %v863
        %v1714 = vunpack.c.l.s4 1983009808
        %v1715 = vunpack.c.0.s8 %v1714
        %v1716 = vlaneseq
        %v1717 = vshrl.u32 %v1716, 7
        %v1718 = vsub.s32 %v1715, %v1717
        %v1719 = vrot.slane %v1711, %v1718
        %v1721 = vunpack.c.l.s4 1983009808
        %v1722 = vunpack.c.0.s8 %v1721
        %v1723 = vlaneseq
        %v1724 = vshrl.u32 %v1723, 7
        %v1725 = vsub.s32 %v1722, %v1724
        %v1726 = vrot.slane %v1712, %v1725
        %v1727 = vcombine.low %v831, %v895
        %v1728 = vcombine.high %v831, %v895
        %v1730 = vunpack.c.l.s4 1983009808
        %v1731 = vunpack.c.0.s8 %v1730
        %v1732 = vlaneseq
        %v1733 = vshrl.u32 %v1732, 7
        %v1734 = vsub.s32 %v1731, %v1733
        %v1735 = vrot.slane %v1727, %v1734
        %v1737 = vunpack.c.l.s4 1983009808
        %v1738 = vunpack.c.0.s8 %v1737
        %v1739 = vlaneseq
        %v1740 = vshrl.u32 %v1739, 7
        %v1741 = vsub.s32 %v1738, %v1740
        %v1742 = vrot.slane %v1728, %v1741
        %v1743 = vcombine.low %v1687, %v1703
        %v1744 = vcombine.high %v1687, %v1703
        %v1746 = vunpack.c.l.s4 1934713408
        %v1747 = vunpack.c.0.s8 %v1746
        %v1748 = vlaneseq
        %v1749 = vshrl.u32 %v1748, 7
        %v1750 = vsub.s32 %v1747, %v1749
        %v1751 = vrot.slane %v1743, %v1750
        %v1753 = vunpack.c.l.s4 1934713408
        %v1754 = vunpack.c.0.s8 %v1753
        %v1755 = vlaneseq
        %v1756 = vshrl.u32 %v1755, 7
        %v1757 = vsub.s32 %v1754, %v1756
        %v1758 = vrot.slane %v1744, %v1757
        %v1759 = vcombine.low %v1694, %v1710
        %v1760 = vcombine.high %v1694, %v1710
        %v1762 = vunpack.c.l.s4 1934713408
        %v1763 = vunpack.c.0.s8 %v1762
        %v1764 = vlaneseq
        %v1765 = vshrl.u32 %v1764, 7
        %v1766 = vsub.s32 %v1763, %v1765
        %v1767 = vrot.slane %v1759, %v1766
        %v1769 = vunpack.c.l.s4 1934713408
        %v1770 = vunpack.c.0.s8 %v1769
        %v1771 = vlaneseq
        %v1772 = vshrl.u32 %v1771, 7
        %v1773 = vsub.s32 %v1770, %v1772
        %v1774 = vrot.slane %v1760, %v1773
        %v1775 = vcombine.low %v1719, %v1735
        %v1776 = vcombine.high %v1719, %v1735
        %v1778 = vunpack.c.l.s4 1934713408
        %v1779 = vunpack.c.0.s8 %v1778
        %v1780 = vlaneseq
        %v1781 = vshrl.u32 %v1780, 7
        %v1782 = vsub.s32 %v1779, %v1781
        %v1783 = vrot.slane %v1775, %v1782
        %v1785 = vunpack.c.l.s4 1934713408
        %v1786 = vunpack.c.0.s8 %v1785
        %v1787 = vlaneseq
        %v1788 = vshrl.u32 %v1787, 7
        %v1789 = vsub.s32 %v1786, %v1788
        %v1790 = vrot.slane %v1776, %v1789
        %v1791 = vcombine.low %v1726, %v1742
        %v1792 = vcombine.high %v1726, %v1742
        %v1794 = vunpack.c.l.s4 1934713408
        %v1795 = vunpack.c.0.s8 %v1794
        %v1796 = vlaneseq
        %v1797 = vshrl.u32 %v1796, 7
        %v1798 = vsub.s32 %v1795, %v1797
        %v1799 = vrot.slane %v1791, %v1798
        %v1801 = vunpack.c.l.s4 1934713408
        %v1802 = vunpack.c.0.s8 %v1801
        %v1803 = vlaneseq
        %v1804 = vshrl.u32 %v1803, 7
        %v1805 = vsub.s32 %v1802, %v1804
        %v1806 = vrot.slane %v1792, %v1805
        %v1807 = vcombine.low %v1751, %v1783
        %v1808 = vcombine.high %v1751, %v1783
        %v1809 = vcombine.low %v1758, %v1790
        %v1810 = vcombine.high %v1758, %v1790
        %v1811 = vcombine.low %v1767, %v1799
        %v1812 = vcombine.high %v1767, %v1799
        %v1813 = vcombine.low %v1774, %v1806
        %v1814 = vcombine.high %v1774, %v1806
        %v1815 = vcombine.low %v927, %v991
        %v1816 = vcombine.high %v927, %v991
        %v1818 = vunpack.c.l.s4 1983009808
        %v1819 = vunpack.c.0.s8 %v1818
        %v1820 = vlaneseq
        %v1821 = vshrl.u32 %v1820, 7
        %v1822 = vsub.s32 %v1819, %v1821
        %v1823 = vrot.slane %v1815, %v1822
        %v1825 = vunpack.c.l.s4 1983009808
        %v1826 = vunpack.c.0.s8 %v1825
        %v1827 = vlaneseq
        %v1828 = vshrl.u32 %v1827, 7
        %v1829 = vsub.s32 %v1826, %v1828
        %v1830 = vrot.slane %v1816, %v1829
        %v1831 = vcombine.low %v959, %v1023
        %v1832 = vcombine.high %v959, %v1023
        %v1834 = vunpack.c.l.s4 1983009808
        %v1835 = vunpack.c.0.s8 %v1834
        %v1836 = vlaneseq
        %v1837 = vshrl.u32 %v1836, 7
        %v1838 = vsub.s32 %v1835, %v1837
        %v1839 = vrot.slane %v1831, %v1838
        %v1841 = vunpack.c.l.s4 1983009808
        %v1842 = vunpack.c.0.s8 %v1841
        %v1843 = vlaneseq
        %v1844 = vshrl.u32 %v1843, 7
        %v1845 = vsub.s32 %v1842, %v1844
        %v1846 = vrot.slane %v1832, %v1845
        %v1847 = vcombine.low %v1055, %v1119
        %v1848 = vcombine.high %v1055, %v1119
        %v1850 = vunpack.c.l.s4 1983009808
        %v1851 = vunpack.c.0.s8 %v1850
        %v1852 = vlaneseq
        %v1853 = vshrl.u32 %v1852, 7
        %v1854 = vsub.s32 %v1851, %v1853
        %v1855 = vrot.slane %v1847, %v1854
        %v1857 = vunpack.c.l.s4 1983009808
        %v1858 = vunpack.c.0.s8 %v1857
        %v1859 = vlaneseq
        %v1860 = vshrl.u32 %v1859, 7
        %v1861 = vsub.s32 %v1858, %v1860
        %v1862 = vrot.slane %v1848, %v1861
        %v1863 = vcombine.low %v1087, %v1151
        %v1864 = vcombine.high %v1087, %v1151
        %v1866 = vunpack.c.l.s4 1983009808
        %v1867 = vunpack.c.0.s8 %v1866
        %v1868 = vlaneseq
        %v1869 = vshrl.u32 %v1868, 7
        %v1870 = vsub.s32 %v1867, %v1869
        %v1871 = vrot.slane %v1863, %v1870
        %v1873 = vunpack.c.l.s4 1983009808
        %v1874 = vunpack.c.0.s8 %v1873
        %v1875 = vlaneseq
        %v1876 = vshrl.u32 %v1875, 7
        %v1877 = vsub.s32 %v1874, %v1876
        %v1878 = vrot.slane %v1864, %v1877
        %v1879 = vcombine.low %v1823, %v1839
        %v1880 = vcombine.high %v1823, %v1839
        %v1882 = vunpack.c.l.s4 1934713408
        %v1883 = vunpack.c.0.s8 %v1882
        %v1884 = vlaneseq
        %v1885 = vshrl.u32 %v1884, 7
        %v1886 = vsub.s32 %v1883, %v1885
        %v1887 = vrot.slane %v1879, %v1886
        %v1889 = vunpack.c.l.s4 1934713408
        %v1890 = vunpack.c.0.s8 %v1889
        %v1891 = vlaneseq
        %v1892 = vshrl.u32 %v1891, 7
        %v1893 = vsub.s32 %v1890, %v1892
        %v1894 = vrot.slane %v1880, %v1893
        %v1895 = vcombine.low %v1830, %v1846
        %v1896 = vcombine.high %v1830, %v1846
        %v1898 = vunpack.c.l.s4 1934713408
        %v1899 = vunpack.c.0.s8 %v1898
        %v1900 = vlaneseq
        %v1901 = vshrl.u32 %v1900, 7
        %v1902 = vsub.s32 %v1899, %v1901
        %v1903 = vrot.slane %v1895, %v1902
        %v1905 = vunpack.c.l.s4 1934713408
        %v1906 = vunpack.c.0.s8 %v1905
        %v1907 = vlaneseq
        %v1908 = vshrl.u32 %v1907, 7
        %v1909 = vsub.s32 %v1906, %v1908
        %v1910 = vrot.slane %v1896, %v1909
        %v1911 = vcombine.low %v1855, %v1871
        %v1912 = vcombine.high %v1855, %v1871
        %v1914 = vunpack.c.l.s4 1934713408
        %v1915 = vunpack.c.0.s8 %v1914
        %v1916 = vlaneseq
        %v1917 = vshrl.u32 %v1916, 7
        %v1918 = vsub.s32 %v1915, %v1917
        %v1919 = vrot.slane %v1911, %v1918
        %v1921 = vunpack.c.l.s4 1934713408
        %v1922 = vunpack.c.0.s8 %v1921
        %v1923 = vlaneseq
        %v1924 = vshrl.u32 %v1923, 7
        %v1925 = vsub.s32 %v1922, %v1924
        %v1926 = vrot.slane %v1912, %v1925
        %v1927 = vcombine.low %v1862, %v1878
        %v1928 = vcombine.high %v1862, %v1878
        %v1930 = vunpack.c.l.s4 1934713408
        %v1931 = vunpack.c.0.s8 %v1930
        %v1932 = vlaneseq
        %v1933 = vshrl.u32 %v1932, 7
        %v1934 = vsub.s32 %v1931, %v1933
        %v1935 = vrot.slane %v1927, %v1934
        %v1937 = vunpack.c.l.s4 1934713408
        %v1938 = vunpack.c.0.s8 %v1937
        %v1939 = vlaneseq
        %v1940 = vshrl.u32 %v1939, 7
        %v1941 = vsub.s32 %v1938, %v1940
        %v1942 = vrot.slane %v1928, %v1941
        %v1943 = vcombine.low %v1887, %v1919
        %v1944 = vcombine.high %v1887, %v1919
        %v1945 = vcombine.low %v1894, %v1926
        %v1946 = vcombine.high %v1894, %v1926
        %v1947 = vcombine.low %v1903, %v1935
        %v1948 = vcombine.high %v1903, %v1935
        %v1949 = vcombine.low %v1910, %v1942
        %v1950 = vcombine.high %v1910, %v1942
        %v1951 = vcombine.low %v1183, %v1247
        %v1952 = vcombine.high %v1183, %v1247
        %v1954 = vunpack.c.l.s4 1983009808
        %v1955 = vunpack.c.0.s8 %v1954
        %v1956 = vlaneseq
        %v1957 = vshrl.u32 %v1956, 7
        %v1958 = vsub.s32 %v1955, %v1957
        %v1959 = vrot.slane %v1951, %v1958
        %v1961 = vunpack.c.l.s4 1983009808
        %v1962 = vunpack.c.0.s8 %v1961
        %v1963 = vlaneseq
        %v1964 = vshrl.u32 %v1963, 7
        %v1965 = vsub.s32 %v1962, %v1964
        %v1966 = vrot.slane %v1952, %v1965
        %v1967 = vcombine.low %v1215, %v1279
        %v1968 = vcombine.high %v1215, %v1279
        %v1970 = vunpack.c.l.s4 1983009808
        %v1971 = vunpack.c.0.s8 %v1970
        %v1972 = vlaneseq
        %v1973 = vshrl.u32 %v1972, 7
        %v1974 = vsub.s32 %v1971, %v1973
        %v1975 = vrot.slane %v1967, %v1974
        %v1977 = vunpack.c.l.s4 1983009808
        %v1978 = vunpack.c.0.s8 %v1977
        %v1979 = vlaneseq
        %v1980 = vshrl.u32 %v1979, 7
        %v1981 = vsub.s32 %v1978, %v1980
        %v1982 = vrot.slane %v1968, %v1981
        %v1983 = vcombine.low %v1311, %v1375
        %v1984 = vcombine.high %v1311, %v1375
        %v1986 = vunpack.c.l.s4 1983009808
        %v1987 = vunpack.c.0.s8 %v1986
        %v1988 = vlaneseq
        %v1989 = vshrl.u32 %v1988, 7
        %v1990 = vsub.s32 %v1987, %v1989
        %v1991 = vrot.slane %v1983, %v1990
        %v1993 = vunpack.c.l.s4 1983009808
        %v1994 = vunpack.c.0.s8 %v1993
        %v1995 = vlaneseq
        %v1996 = vshrl.u32 %v1995, 7
        %v1997 = vsub.s32 %v1994, %v1996
        %v1998 = vrot.slane %v1984, %v1997
        %v1999 = vcombine.low %v1343, %v1407
        %v2000 = vcombine.high %v1343, %v1407
        %v2002 = vunpack.c.l.s4 1983009808
        %v2003 = vunpack.c.0.s8 %v2002
        %v2004 = vlaneseq
        %v2005 = vshrl.u32 %v2004, 7
        %v2006 = vsub.s32 %v2003, %v2005
        %v2007 = vrot.slane %v1999, %v2006
        %v2009 = vunpack.c.l.s4 1983009808
        %v2010 = vunpack.c.0.s8 %v2009
        %v2011 = vlaneseq
        %v2012 = vshrl.u32 %v2011, 7
        %v2013 = vsub.s32 %v2010, %v2012
        %v2014 = vrot.slane %v2000, %v2013
        %v2015 = vcombine.low %v1959, %v1975
        %v2016 = vcombine.high %v1959, %v1975
        %v2018 = vunpack.c.l.s4 1934713408
        %v2019 = vunpack.c.0.s8 %v2018
        %v2020 = vlaneseq
        %v2021 = vshrl.u32 %v2020, 7
        %v2022 = vsub.s32 %v2019, %v2021
        %v2023 = vrot.slane %v2015, %v2022
        %v2025 = vunpack.c.l.s4 1934713408
        %v2026 = vunpack.c.0.s8 %v2025
        %v2027 = vlaneseq
        %v2028 = vshrl.u32 %v2027, 7
        %v2029 = vsub.s32 %v2026, %v2028
        %v2030 = vrot.slane %v2016, %v2029
        %v2031 = vcombine.low %v1966, %v1982
        %v2032 = vcombine.high %v1966, %v1982
        %v2034 = vunpack.c.l.s4 1934713408
        %v2035 = vunpack.c.0.s8 %v2034
        %v2036 = vlaneseq
        %v2037 = vshrl.u32 %v2036, 7
        %v2038 = vsub.s32 %v2035, %v2037
        %v2039 = vrot.slane %v2031, %v2038
        %v2041 = vunpack.c.l.s4 1934713408
        %v2042 = vunpack.c.0.s8 %v2041
        %v2043 = vlaneseq
        %v2044 = vshrl.u32 %v2043, 7
        %v2045 = vsub.s32 %v2042, %v2044
        %v2046 = vrot.slane %v2032, %v2045
        %v2047 = vcombine.low %v1991, %v2007
        %v2048 = vcombine.high %v1991, %v2007
        %v2050 = vunpack.c.l.s4 1934713408
        %v2051 = vunpack.c.0.s8 %v2050
        %v2052 = vlaneseq
        %v2053 = vshrl.u32 %v2052, 7
        %v2054 = vsub.s32 %v2051, %v2053
        %v2055 = vrot.slane %v2047, %v2054
        %v2057 = vunpack.c.l.s4 1934713408
        %v2058 = vunpack.c.0.s8 %v2057
        %v2059 = vlaneseq
        %v2060 = vshrl.u32 %v2059, 7
        %v2061 = vsub.s32 %v2058, %v2060
        %v2062 = vrot.slane %v2048, %v2061
        %v2063 = vcombine.low %v1998, %v2014
        %v2064 = vcombine.high %v1998, %v2014
        %v2066 = vunpack.c.l.s4 1934713408
        %v2067 = vunpack.c.0.s8 %v2066
        %v2068 = vlaneseq
        %v2069 = vshrl.u32 %v2068, 7
        %v2070 = vsub.s32 %v2067, %v2069
        %v2071 = vrot.slane %v2063, %v2070
        %v2073 = vunpack.c.l.s4 1934713408
        %v2074 = vunpack.c.0.s8 %v2073
        %v2075 = vlaneseq
        %v2076 = vshrl.u32 %v2075, 7
        %v2077 = vsub.s32 %v2074, %v2076
        %v2078 = vrot.slane %v2064, %v2077
        %v2079 = vcombine.low %v2023, %v2055
        %v2080 = vcombine.high %v2023, %v2055
        %v2081 = vcombine.low %v2030, %v2062
        %v2082 = vcombine.high %v2030, %v2062
        %v2083 = vcombine.low %v2039, %v2071
        %v2084 = vcombine.high %v2039, %v2071
        %v2085 = vcombine.low %v2046, %v2078
        %v2086 = vcombine.high %v2046, %v2078
        %v2087 = vcombine.low %v1439, %v1503
        %v2088 = vcombine.high %v1439, %v1503
        %v2090 = vunpack.c.l.s4 1983009808
        %v2091 = vunpack.c.0.s8 %v2090
        %v2092 = vlaneseq
        %v2093 = vshrl.u32 %v2092, 7
        %v2094 = vsub.s32 %v2091, %v2093
        %v2095 = vrot.slane %v2087, %v2094
        %v2097 = vunpack.c.l.s4 1983009808
        %v2098 = vunpack.c.0.s8 %v2097
        %v2099 = vlaneseq
        %v2100 = vshrl.u32 %v2099, 7
        %v2101 = vsub.s32 %v2098, %v2100
        %v2102 = vrot.slane %v2088, %v2101
        %v2103 = vcombine.low %v1471, %v1535
        %v2104 = vcombine.high %v1471, %v1535
        %v2106 = vunpack.c.l.s4 1983009808
        %v2107 = vunpack.c.0.s8 %v2106
        %v2108 = vlaneseq
        %v2109 = vshrl.u32 %v2108, 7
        %v2110 = vsub.s32 %v2107, %v2109
        %v2111 = vrot.slane %v2103, %v2110
        %v2113 = vunpack.c.l.s4 1983009808
        %v2114 = vunpack.c.0.s8 %v2113
        %v2115 = vlaneseq
        %v2116 = vshrl.u32 %v2115, 7
        %v2117 = vsub.s32 %v2114, %v2116
        %v2118 = vrot.slane %v2104, %v2117
        %v2119 = vcombine.low %v1567, %v1631
        %v2120 = vcombine.high %v1567, %v1631
        %v2122 = vunpack.c.l.s4 1983009808
        %v2123 = vunpack.c.0.s8 %v2122
        %v2124 = vlaneseq
        %v2125 = vshrl.u32 %v2124, 7
        %v2126 = vsub.s32 %v2123, %v2125
        %v2127 = vrot.slane %v2119, %v2126
        %v2129 = vunpack.c.l.s4 1983009808
        %v2130 = vunpack.c.0.s8 %v2129
        %v2131 = vlaneseq
        %v2132 = vshrl.u32 %v2131, 7
        %v2133 = vsub.s32 %v2130, %v2132
        %v2134 = vrot.slane %v2120, %v2133
        %v2135 = vcombine.low %v1599, %v1663
        %v2136 = vcombine.high %v1599, %v1663
        %v2138 = vunpack.c.l.s4 1983009808
        %v2139 = vunpack.c.0.s8 %v2138
        %v2140 = vlaneseq
        %v2141 = vshrl.u32 %v2140, 7
        %v2142 = vsub.s32 %v2139, %v2141
        %v2143 = vrot.slane %v2135, %v2142
        %v2145 = vunpack.c.l.s4 1983009808
        %v2146 = vunpack.c.0.s8 %v2145
        %v2147 = vlaneseq
        %v2148 = vshrl.u32 %v2147, 7
        %v2149 = vsub.s32 %v2146, %v2148
        %v2150 = vrot.slane %v2136, %v2149
        %v2151 = vcombine.low %v2095, %v2111
        %v2152 = vcombine.high %v2095, %v2111
        %v2154 = vunpack.c.l.s4 1934713408
        %v2155 = vunpack.c.0.s8 %v2154
        %v2156 = vlaneseq
        %v2157 = vshrl.u32 %v2156, 7
        %v2158 = vsub.s32 %v2155, %v2157
        %v2159 = vrot.slane %v2151, %v2158
        %v2161 = vunpack.c.l.s4 1934713408
        %v2162 = vunpack.c.0.s8 %v2161
        %v2163 = vlaneseq
        %v2164 = vshrl.u32 %v2163, 7
        %v2165 = vsub.s32 %v2162, %v2164
        %v2166 = vrot.slane %v2152, %v2165
        %v2167 = vcombine.low %v2102, %v2118
        %v2168 = vcombine.high %v2102, %v2118
        %v2170 = vunpack.c.l.s4 1934713408
        %v2171 = vunpack.c.0.s8 %v2170
        %v2172 = vlaneseq
        %v2173 = vshrl.u32 %v2172, 7
        %v2174 = vsub.s32 %v2171, %v2173
        %v2175 = vrot.slane %v2167, %v2174
        %v2177 = vunpack.c.l.s4 1934713408
        %v2178 = vunpack.c.0.s8 %v2177
        %v2179 = vlaneseq
        %v2180 = vshrl.u32 %v2179, 7
        %v2181 = vsub.s32 %v2178, %v2180
        %v2182 = vrot.slane %v2168, %v2181
        %v2183 = vcombine.low %v2127, %v2143
        %v2184 = vcombine.high %v2127, %v2143
        %v2186 = vunpack.c.l.s4 1934713408
        %v2187 = vunpack.c.0.s8 %v2186
        %v2188 = vlaneseq
        %v2189 = vshrl.u32 %v2188, 7
        %v2190 = vsub.s32 %v2187, %v2189
        %v2191 = vrot.slane %v2183, %v2190
        %v2193 = vunpack.c.l.s4 1934713408
        %v2194 = vunpack.c.0.s8 %v2193
        %v2195 = vlaneseq
        %v2196 = vshrl.u32 %v2195, 7
        %v2197 = vsub.s32 %v2194, %v2196
        %v2198 = vrot.slane %v2184, %v2197
        %v2199 = vcombine.low %v2134, %v2150
        %v2200 = vcombine.high %v2134, %v2150
        %v2202 = vunpack.c.l.s4 1934713408
        %v2203 = vunpack.c.0.s8 %v2202
        %v2204 = vlaneseq
        %v2205 = vshrl.u32 %v2204, 7
        %v2206 = vsub.s32 %v2203, %v2205
        %v2207 = vrot.slane %v2199, %v2206
        %v2209 = vunpack.c.l.s4 1934713408
        %v2210 = vunpack.c.0.s8 %v2209
        %v2211 = vlaneseq
        %v2212 = vshrl.u32 %v2211, 7
        %v2213 = vsub.s32 %v2210, %v2212
        %v2214 = vrot.slane %v2200, %v2213
        %v2215 = vcombine.low %v2159, %v2191
        %v2216 = vcombine.high %v2159, %v2191
        %v2217 = vcombine.low %v2166, %v2198
        %v2218 = vcombine.high %v2166, %v2198
        %v2219 = vcombine.low %v2175, %v2207
        %v2220 = vcombine.high %v2175, %v2207
        %v2221 = vcombine.low %v2182, %v2214
        %v2222 = vcombine.high %v2182, %v2214
        %v2223 = vcombine.low %v1807, %v1809
        %v2224 = vcombine.high %v1807, %v1809
        %v2226 = vunpack.c.l.s4 1983009808
        %v2227 = vunpack.c.0.s8 %v2226
        %v2228 = vlaneseq
        %v2229 = vshrl.u32 %v2228, 7
        %v2230 = vsub.s32 %v2227, %v2229
        %v2231 = vrot.slane %v2223, %v2230
        %v2233 = vunpack.c.l.s4 1983009808
        %v2234 = vunpack.c.0.s8 %v2233
        %v2235 = vlaneseq
        %v2236 = vshrl.u32 %v2235, 7
        %v2237 = vsub.s32 %v2234, %v2236
        %v2238 = vrot.slane %v2224, %v2237
        %v2239 = vcombine.low %v1808, %v1810
        %v2240 = vcombine.high %v1808, %v1810
        %v2242 = vunpack.c.l.s4 1983009808
        %v2243 = vunpack.c.0.s8 %v2242
        %v2244 = vlaneseq
        %v2245 = vshrl.u32 %v2244, 7
        %v2246 = vsub.s32 %v2243, %v2245
        %v2247 = vrot.slane %v2239, %v2246
        %v2249 = vunpack.c.l.s4 1983009808
        %v2250 = vunpack.c.0.s8 %v2249
        %v2251 = vlaneseq
        %v2252 = vshrl.u32 %v2251, 7
        %v2253 = vsub.s32 %v2250, %v2252
        %v2254 = vrot.slane %v2240, %v2253
        %v2255 = vcombine.low %v1811, %v1813
        %v2256 = vcombine.high %v1811, %v1813
        %v2258 = vunpack.c.l.s4 1983009808
        %v2259 = vunpack.c.0.s8 %v2258
        %v2260 = vlaneseq
        %v2261 = vshrl.u32 %v2260, 7
        %v2262 = vsub.s32 %v2259, %v2261
        %v2263 = vrot.slane %v2255, %v2262
        %v2265 = vunpack.c.l.s4 1983009808
        %v2266 = vunpack.c.0.s8 %v2265
        %v2267 = vlaneseq
        %v2268 = vshrl.u32 %v2267, 7
        %v2269 = vsub.s32 %v2266, %v2268
        %v2270 = vrot.slane %v2256, %v2269
        %v2271 = vcombine.low %v1812, %v1814
        %v2272 = vcombine.high %v1812, %v1814
        %v2274 = vunpack.c.l.s4 1983009808
        %v2275 = vunpack.c.0.s8 %v2274
        %v2276 = vlaneseq
        %v2277 = vshrl.u32 %v2276, 7
        %v2278 = vsub.s32 %v2275, %v2277
        %v2279 = vrot.slane %v2271, %v2278
        %v2281 = vunpack.c.l.s4 1983009808
        %v2282 = vunpack.c.0.s8 %v2281
        %v2283 = vlaneseq
        %v2284 = vshrl.u32 %v2283, 7
        %v2285 = vsub.s32 %v2282, %v2284
        %v2286 = vrot.slane %v2272, %v2285
        %v2287 = vcombine.low %v2231, %v2247
        %v2288 = vcombine.high %v2231, %v2247
        %v2290 = vunpack.c.l.s4 1934713408
        %v2291 = vunpack.c.0.s8 %v2290
        %v2292 = vlaneseq
        %v2293 = vshrl.u32 %v2292, 7
        %v2294 = vsub.s32 %v2291, %v2293
        %v2295 = vrot.slane %v2287, %v2294
        %v2297 = vunpack.c.l.s4 1934713408
        %v2298 = vunpack.c.0.s8 %v2297
        %v2299 = vlaneseq
        %v2300 = vshrl.u32 %v2299, 7
        %v2301 = vsub.s32 %v2298, %v2300
        %v2302 = vrot.slane %v2288, %v2301
        %v2303 = vcombine.low %v2238, %v2254
        %v2304 = vcombine.high %v2238, %v2254
        %v2306 = vunpack.c.l.s4 1934713408
        %v2307 = vunpack.c.0.s8 %v2306
        %v2308 = vlaneseq
        %v2309 = vshrl.u32 %v2308, 7
        %v2310 = vsub.s32 %v2307, %v2309
        %v2311 = vrot.slane %v2303, %v2310
        %v2313 = vunpack.c.l.s4 1934713408
        %v2314 = vunpack.c.0.s8 %v2313
        %v2315 = vlaneseq
        %v2316 = vshrl.u32 %v2315, 7
        %v2317 = vsub.s32 %v2314, %v2316
        %v2318 = vrot.slane %v2304, %v2317
        %v2319 = vcombine.low %v2263, %v2279
        %v2320 = vcombine.high %v2263, %v2279
        %v2322 = vunpack.c.l.s4 1934713408
        %v2323 = vunpack.c.0.s8 %v2322
        %v2324 = vlaneseq
        %v2325 = vshrl.u32 %v2324, 7
        %v2326 = vsub.s32 %v2323, %v2325
        %v2327 = vrot.slane %v2319, %v2326
        %v2329 = vunpack.c.l.s4 1934713408
        %v2330 = vunpack.c.0.s8 %v2329
        %v2331 = vlaneseq
        %v2332 = vshrl.u32 %v2331, 7
        %v2333 = vsub.s32 %v2330, %v2332
        %v2334 = vrot.slane %v2320, %v2333
        %v2335 = vcombine.low %v2270, %v2286
        %v2336 = vcombine.high %v2270, %v2286
        %v2338 = vunpack.c.l.s4 1934713408
        %v2339 = vunpack.c.0.s8 %v2338
        %v2340 = vlaneseq
        %v2341 = vshrl.u32 %v2340, 7
        %v2342 = vsub.s32 %v2339, %v2341
        %v2343 = vrot.slane %v2335, %v2342
        %v2345 = vunpack.c.l.s4 1934713408
        %v2346 = vunpack.c.0.s8 %v2345
        %v2347 = vlaneseq
        %v2348 = vshrl.u32 %v2347, 7
        %v2349 = vsub.s32 %v2346, %v2348
        %v2350 = vrot.slane %v2336, %v2349
        %v2351 = vcombine.low %v2295, %v2327
        %v2352 = vcombine.high %v2295, %v2327
        %v2353 = vcombine.low %v2302, %v2334
        %v2354 = vcombine.high %v2302, %v2334
        %v2355 = vcombine.low %v2311, %v2343
        %v2356 = vcombine.high %v2311, %v2343
        %v2357 = vcombine.low %v2318, %v2350
        %v2358 = vcombine.high %v2318, %v2350
        %v2359 = vcombine.low %v1943, %v1945
        %v2360 = vcombine.high %v1943, %v1945
        %v2362 = vunpack.c.l.s4 1983009808
        %v2363 = vunpack.c.0.s8 %v2362
        %v2364 = vlaneseq
        %v2365 = vshrl.u32 %v2364, 7
        %v2366 = vsub.s32 %v2363, %v2365
        %v2367 = vrot.slane %v2359, %v2366
        %v2369 = vunpack.c.l.s4 1983009808
        %v2370 = vunpack.c.0.s8 %v2369
        %v2371 = vlaneseq
        %v2372 = vshrl.u32 %v2371, 7
        %v2373 = vsub.s32 %v2370, %v2372
        %v2374 = vrot.slane %v2360, %v2373
        %v2375 = vcombine.low %v1944, %v1946
        %v2376 = vcombine.high %v1944, %v1946
        %v2378 = vunpack.c.l.s4 1983009808
        %v2379 = vunpack.c.0.s8 %v2378
        %v2380 = vlaneseq
        %v2381 = vshrl.u32 %v2380, 7
        %v2382 = vsub.s32 %v2379, %v2381
        %v2383 = vrot.slane %v2375, %v2382
        %v2385 = vunpack.c.l.s4 1983009808
        %v2386 = vunpack.c.0.s8 %v2385
        %v2387 = vlaneseq
        %v2388 = vshrl.u32 %v2387, 7
        %v2389 = vsub.s32 %v2386, %v2388
        %v2390 = vrot.slane %v2376, %v2389
        %v2391 = vcombine.low %v1947, %v1949
        %v2392 = vcombine.high %v1947, %v1949
        %v2394 = vunpack.c.l.s4 1983009808
        %v2395 = vunpack.c.0.s8 %v2394
        %v2396 = vlaneseq
        %v2397 = vshrl.u32 %v2396, 7
        %v2398 = vsub.s32 %v2395, %v2397
        %v2399 = vrot.slane %v2391, %v2398
        %v2401 = vunpack.c.l.s4 1983009808
        %v2402 = vunpack.c.0.s8 %v2401
        %v2403 = vlaneseq
        %v2404 = vshrl.u32 %v2403, 7
        %v2405 = vsub.s32 %v2402, %v2404
        %v2406 = vrot.slane %v2392, %v2405
        %v2407 = vcombine.low %v1948, %v1950
        %v2408 = vcombine.high %v1948, %v1950
        %v2410 = vunpack.c.l.s4 1983009808
        %v2411 = vunpack.c.0.s8 %v2410
        %v2412 = vlaneseq
        %v2413 = vshrl.u32 %v2412, 7
        %v2414 = vsub.s32 %v2411, %v2413
        %v2415 = vrot.slane %v2407, %v2414
        %v2417 = vunpack.c.l.s4 1983009808
        %v2418 = vunpack.c.0.s8 %v2417
        %v2419 = vlaneseq
        %v2420 = vshrl.u32 %v2419, 7
        %v2421 = vsub.s32 %v2418, %v2420
        %v2422 = vrot.slane %v2408, %v2421
        %v2423 = vcombine.low %v2367, %v2383
        %v2424 = vcombine.high %v2367, %v2383
        %v2426 = vunpack.c.l.s4 1934713408
        %v2427 = vunpack.c.0.s8 %v2426
        %v2428 = vlaneseq
        %v2429 = vshrl.u32 %v2428, 7
        %v2430 = vsub.s32 %v2427, %v2429
        %v2431 = vrot.slane %v2423, %v2430
        %v2433 = vunpack.c.l.s4 1934713408
        %v2434 = vunpack.c.0.s8 %v2433
        %v2435 = vlaneseq
        %v2436 = vshrl.u32 %v2435, 7
        %v2437 = vsub.s32 %v2434, %v2436
        %v2438 = vrot.slane %v2424, %v2437
        %v2439 = vcombine.low %v2374, %v2390
        %v2440 = vcombine.high %v2374, %v2390
        %v2442 = vunpack.c.l.s4 1934713408
        %v2443 = vunpack.c.0.s8 %v2442
        %v2444 = vlaneseq
        %v2445 = vshrl.u32 %v2444, 7
        %v2446 = vsub.s32 %v2443, %v2445
        %v2447 = vrot.slane %v2439, %v2446
        %v2449 = vunpack.c.l.s4 1934713408
        %v2450 = vunpack.c.0.s8 %v2449
        %v2451 = vlaneseq
        %v2452 = vshrl.u32 %v2451, 7
        %v2453 = vsub.s32 %v2450, %v2452
        %v2454 = vrot.slane %v2440, %v2453
        %v2455 = vcombine.low %v2399, %v2415
        %v2456 = vcombine.high %v2399, %v2415
        %v2458 = vunpack.c.l.s4 1934713408
        %v2459 = vunpack.c.0.s8 %v2458
        %v2460 = vlaneseq
        %v2461 = vshrl.u32 %v2460, 7
        %v2462 = vsub.s32 %v2459, %v2461
        %v2463 = vrot.slane %v2455, %v2462
        %v2465 = vunpack.c.l.s4 1934713408
        %v2466 = vunpack.c.0.s8 %v2465
        %v2467 = vlaneseq
        %v2468 = vshrl.u32 %v2467, 7
        %v2469 = vsub.s32 %v2466, %v2468
        %v2470 = vrot.slane %v2456, %v2469
        %v2471 = vcombine.low %v2406, %v2422
        %v2472 = vcombine.high %v2406, %v2422
        %v2474 = vunpack.c.l.s4 1934713408
        %v2475 = vunpack.c.0.s8 %v2474
        %v2476 = vlaneseq
        %v2477 = vshrl.u32 %v2476, 7
        %v2478 = vsub.s32 %v2475, %v2477
        %v2479 = vrot.slane %v2471, %v2478
        %v2481 = vunpack.c.l.s4 1934713408
        %v2482 = vunpack.c.0.s8 %v2481
        %v2483 = vlaneseq
        %v2484 = vshrl.u32 %v2483, 7
        %v2485 = vsub.s32 %v2482, %v2484
        %v2486 = vrot.slane %v2472, %v2485
        %v2487 = vcombine.low %v2431, %v2463
        %v2488 = vcombine.high %v2431, %v2463
        %v2489 = vcombine.low %v2438, %v2470
        %v2490 = vcombine.high %v2438, %v2470
        %v2491 = vcombine.low %v2447, %v2479
        %v2492 = vcombine.high %v2447, %v2479
        %v2493 = vcombine.low %v2454, %v2486
        %v2494 = vcombine.high %v2454, %v2486
        %v2495 = vcombine.low %v2079, %v2081
        %v2496 = vcombine.high %v2079, %v2081
        %v2498 = vunpack.c.l.s4 1983009808
        %v2499 = vunpack.c.0.s8 %v2498
        %v2500 = vlaneseq
        %v2501 = vshrl.u32 %v2500, 7
        %v2502 = vsub.s32 %v2499, %v2501
        %v2503 = vrot.slane %v2495, %v2502
        %v2505 = vunpack.c.l.s4 1983009808
        %v2506 = vunpack.c.0.s8 %v2505
        %v2507 = vlaneseq
        %v2508 = vshrl.u32 %v2507, 7
        %v2509 = vsub.s32 %v2506, %v2508
        %v2510 = vrot.slane %v2496, %v2509
        %v2511 = vcombine.low %v2080, %v2082
        %v2512 = vcombine.high %v2080, %v2082
        %v2514 = vunpack.c.l.s4 1983009808
        %v2515 = vunpack.c.0.s8 %v2514
        %v2516 = vlaneseq
        %v2517 = vshrl.u32 %v2516, 7
        %v2518 = vsub.s32 %v2515, %v2517
        %v2519 = vrot.slane %v2511, %v2518
        %v2521 = vunpack.c.l.s4 1983009808
        %v2522 = vunpack.c.0.s8 %v2521
        %v2523 = vlaneseq
        %v2524 = vshrl.u32 %v2523, 7
        %v2525 = vsub.s32 %v2522, %v2524
        %v2526 = vrot.slane %v2512, %v2525
        %v2527 = vcombine.low %v2083, %v2085
        %v2528 = vcombine.high %v2083, %v2085
        %v2530 = vunpack.c.l.s4 1983009808
        %v2531 = vunpack.c.0.s8 %v2530
        %v2532 = vlaneseq
        %v2533 = vshrl.u32 %v2532, 7
        %v2534 = vsub.s32 %v2531, %v2533
        %v2535 = vrot.slane %v2527, %v2534
        %v2537 = vunpack.c.l.s4 1983009808
        %v2538 = vunpack.c.0.s8 %v2537
        %v2539 = vlaneseq
        %v2540 = vshrl.u32 %v2539, 7
        %v2541 = vsub.s32 %v2538, %v2540
        %v2542 = vrot.slane %v2528, %v2541
        %v2543 = vcombine.low %v2084, %v2086
        %v2544 = vcombine.high %v2084, %v2086
        %v2546 = vunpack.c.l.s4 1983009808
        %v2547 = vunpack.c.0.s8 %v2546
        %v2548 = vlaneseq
        %v2549 = vshrl.u32 %v2548, 7
        %v2550 = vsub.s32 %v2547, %v2549
        %v2551 = vrot.slane %v2543, %v2550
        %v2553 = vunpack.c.l.s4 1983009808
        %v2554 = vunpack.c.0.s8 %v2553
        %v2555 = vlaneseq
        %v2556 = vshrl.u32 %v2555, 7
        %v2557 = vsub.s32 %v2554, %v2556
        %v2558 = vrot.slane %v2544, %v2557
        %v2559 = vcombine.low %v2503, %v2519
        %v2560 = vcombine.high %v2503, %v2519
        %v2562 = vunpack.c.l.s4 1934713408
        %v2563 = vunpack.c.0.s8 %v2562
        %v2564 = vlaneseq
        %v2565 = vshrl.u32 %v2564, 7
        %v2566 = vsub.s32 %v2563, %v2565
        %v2567 = vrot.slane %v2559, %v2566
        %v2569 = vunpack.c.l.s4 1934713408
        %v2570 = vunpack.c.0.s8 %v2569
        %v2571 = vlaneseq
        %v2572 = vshrl.u32 %v2571, 7
        %v2573 = vsub.s32 %v2570, %v2572
        %v2574 = vrot.slane %v2560, %v2573
        %v2575 = vcombine.low %v2510, %v2526
        %v2576 = vcombine.high %v2510, %v2526
        %v2578 = vunpack.c.l.s4 1934713408
        %v2579 = vunpack.c.0.s8 %v2578
        %v2580 = vlaneseq
        %v2581 = vshrl.u32 %v2580, 7
        %v2582 = vsub.s32 %v2579, %v2581
        %v2583 = vrot.slane %v2575, %v2582
        %v2585 = vunpack.c.l.s4 1934713408
        %v2586 = vunpack.c.0.s8 %v2585
        %v2587 = vlaneseq
        %v2588 = vshrl.u32 %v2587, 7
        %v2589 = vsub.s32 %v2586, %v2588
        %v2590 = vrot.slane %v2576, %v2589
        %v2591 = vcombine.low %v2535, %v2551
        %v2592 = vcombine.high %v2535, %v2551
        %v2594 = vunpack.c.l.s4 1934713408
        %v2595 = vunpack.c.0.s8 %v2594
        %v2596 = vlaneseq
        %v2597 = vshrl.u32 %v2596, 7
        %v2598 = vsub.s32 %v2595, %v2597
        %v2599 = vrot.slane %v2591, %v2598
        %v2601 = vunpack.c.l.s4 1934713408
        %v2602 = vunpack.c.0.s8 %v2601
        %v2603 = vlaneseq
        %v2604 = vshrl.u32 %v2603, 7
        %v2605 = vsub.s32 %v2602, %v2604
        %v2606 = vrot.slane %v2592, %v2605
        %v2607 = vcombine.low %v2542, %v2558
        %v2608 = vcombine.high %v2542, %v2558
        %v2610 = vunpack.c.l.s4 1934713408
        %v2611 = vunpack.c.0.s8 %v2610
        %v2612 = vlaneseq
        %v2613 = vshrl.u32 %v2612, 7
        %v2614 = vsub.s32 %v2611, %v2613
        %v2615 = vrot.slane %v2607, %v2614
        %v2617 = vunpack.c.l.s4 1934713408
        %v2618 = vunpack.c.0.s8 %v2617
        %v2619 = vlaneseq
        %v2620 = vshrl.u32 %v2619, 7
        %v2621 = vsub.s32 %v2618, %v2620
        %v2622 = vrot.slane %v2608, %v2621
        %v2623 = vcombine.low %v2567, %v2599
        %v2624 = vcombine.high %v2567, %v2599
        %v2625 = vcombine.low %v2574, %v2606
        %v2626 = vcombine.high %v2574, %v2606
        %v2627 = vcombine.low %v2583, %v2615
        %v2628 = vcombine.high %v2583, %v2615
        %v2629 = vcombine.low %v2590, %v2622
        %v2630 = vcombine.high %v2590, %v2622
        %v2631 = vcombine.low %v2215, %v2217
        %v2632 = vcombine.high %v2215, %v2217
        %v2634 = vunpack.c.l.s4 1983009808
        %v2635 = vunpack.c.0.s8 %v2634
        %v2636 = vlaneseq
        %v2637 = vshrl.u32 %v2636, 7
        %v2638 = vsub.s32 %v2635, %v2637
        %v2639 = vrot.slane %v2631, %v2638
        %v2641 = vunpack.c.l.s4 1983009808
        %v2642 = vunpack.c.0.s8 %v2641
        %v2643 = vlaneseq
        %v2644 = vshrl.u32 %v2643, 7
        %v2645 = vsub.s32 %v2642, %v2644
        %v2646 = vrot.slane %v2632, %v2645
        %v2647 = vcombine.low %v2216, %v2218
        %v2648 = vcombine.high %v2216, %v2218
        %v2650 = vunpack.c.l.s4 1983009808
        %v2651 = vunpack.c.0.s8 %v2650
        %v2652 = vlaneseq
        %v2653 = vshrl.u32 %v2652, 7
        %v2654 = vsub.s32 %v2651, %v2653
        %v2655 = vrot.slane %v2647, %v2654
        %v2657 = vunpack.c.l.s4 1983009808
        %v2658 = vunpack.c.0.s8 %v2657
        %v2659 = vlaneseq
        %v2660 = vshrl.u32 %v2659, 7
        %v2661 = vsub.s32 %v2658, %v2660
        %v2662 = vrot.slane %v2648, %v2661
        %v2663 = vcombine.low %v2219, %v2221
        %v2664 = vcombine.high %v2219, %v2221
        %v2666 = vunpack.c.l.s4 1983009808
        %v2667 = vunpack.c.0.s8 %v2666
        %v2668 = vlaneseq
        %v2669 = vshrl.u32 %v2668, 7
        %v2670 = vsub.s32 %v2667, %v2669
        %v2671 = vrot.slane %v2663, %v2670
        %v2673 = vunpack.c.l.s4 1983009808
        %v2674 = vunpack.c.0.s8 %v2673
        %v2675 = vlaneseq
        %v2676 = vshrl.u32 %v2675, 7
        %v2677 = vsub.s32 %v2674, %v2676
        %v2678 = vrot.slane %v2664, %v2677
        %v2679 = vcombine.low %v2220, %v2222
        %v2680 = vcombine.high %v2220, %v2222
        %v2682 = vunpack.c.l.s4 1983009808
        %v2683 = vunpack.c.0.s8 %v2682
        %v2684 = vlaneseq
        %v2685 = vshrl.u32 %v2684, 7
        %v2686 = vsub.s32 %v2683, %v2685
        %v2687 = vrot.slane %v2679, %v2686
        %v2689 = vunpack.c.l.s4 1983009808
        %v2690 = vunpack.c.0.s8 %v2689
        %v2691 = vlaneseq
        %v2692 = vshrl.u32 %v2691, 7
        %v2693 = vsub.s32 %v2690, %v2692
        %v2694 = vrot.slane %v2680, %v2693
        %v2695 = vcombine.low %v2639, %v2655
        %v2696 = vcombine.high %v2639, %v2655
        %v2698 = vunpack.c.l.s4 1934713408
        %v2699 = vunpack.c.0.s8 %v2698
        %v2700 = vlaneseq
        %v2701 = vshrl.u32 %v2700, 7
        %v2702 = vsub.s32 %v2699, %v2701
        %v2703 = vrot.slane %v2695, %v2702
        %v2705 = vunpack.c.l.s4 1934713408
        %v2706 = vunpack.c.0.s8 %v2705
        %v2707 = vlaneseq
        %v2708 = vshrl.u32 %v2707, 7
        %v2709 = vsub.s32 %v2706, %v2708
        %v2710 = vrot.slane %v2696, %v2709
        %v2711 = vcombine.low %v2646, %v2662
        %v2712 = vcombine.high %v2646, %v2662
        %v2714 = vunpack.c.l.s4 1934713408
        %v2715 = vunpack.c.0.s8 %v2714
        %v2716 = vlaneseq
        %v2717 = vshrl.u32 %v2716, 7
        %v2718 = vsub.s32 %v2715, %v2717
        %v2719 = vrot.slane %v2711, %v2718
        %v2721 = vunpack.c.l.s4 1934713408
        %v2722 = vunpack.c.0.s8 %v2721
        %v2723 = vlaneseq
        %v2724 = vshrl.u32 %v2723, 7
        %v2725 = vsub.s32 %v2722, %v2724
        %v2726 = vrot.slane %v2712, %v2725
        %v2727 = vcombine.low %v2671, %v2687
        %v2728 = vcombine.high %v2671, %v2687
        %v2730 = vunpack.c.l.s4 1934713408
        %v2731 = vunpack.c.0.s8 %v2730
        %v2732 = vlaneseq
        %v2733 = vshrl.u32 %v2732, 7
        %v2734 = vsub.s32 %v2731, %v2733
        %v2735 = vrot.slane %v2727, %v2734
        %v2737 = vunpack.c.l.s4 1934713408
        %v2738 = vunpack.c.0.s8 %v2737
        %v2739 = vlaneseq
        %v2740 = vshrl.u32 %v2739, 7
        %v2741 = vsub.s32 %v2738, %v2740
        %v2742 = vrot.slane %v2728, %v2741
        %v2743 = vcombine.low %v2678, %v2694
        %v2744 = vcombine.high %v2678, %v2694
        %v2746 = vunpack.c.l.s4 1934713408
        %v2747 = vunpack.c.0.s8 %v2746
        %v2748 = vlaneseq
        %v2749 = vshrl.u32 %v2748, 7
        %v2750 = vsub.s32 %v2747, %v2749
        %v2751 = vrot.slane %v2743, %v2750
        %v2753 = vunpack.c.l.s4 1934713408
        %v2754 = vunpack.c.0.s8 %v2753
        %v2755 = vlaneseq
        %v2756 = vshrl.u32 %v2755, 7
        %v2757 = vsub.s32 %v2754, %v2756
        %v2758 = vrot.slane %v2744, %v2757
        %v2759 = vcombine.low %v2703, %v2735
        %v2760 = vcombine.high %v2703, %v2735
        %v2761 = vcombine.low %v2710, %v2742
        %v2762 = vcombine.high %v2710, %v2742
        %v2763 = vcombine.low %v2719, %v2751
        %v2764 = vcombine.high %v2719, %v2751
        %v2765 = vcombine.low %v2726, %v2758
        %v2766 = vcombine.high %v2726, %v2758
        %2768 = vrot.lane.b32.xlu0 %v2352, 4
        %v2769 = vpop.permute.xlu0 %2768
        %2772 = vrot.lane.b32.xlu0 %v2353, 8
        %v2773 = vpop.permute.xlu0 %2772
        %2776 = vrot.lane.b32.xlu0 %v2354, 12
        %v2777 = vpop.permute.xlu0 %2776
        %2780 = vrot.lane.b32.xlu0 %v2355, 16
        %v2781 = vpop.permute.xlu0 %2780
        %2784 = vrot.lane.b32.xlu0 %v2356, 20
        %v2785 = vpop.permute.xlu0 %2784
        %2788 = vrot.lane.b32.xlu0 %v2357, 24
        %v2789 = vpop.permute.xlu0 %2788
        %2792 = vrot.lane.b32.xlu0 %v2358, 28
        %v2793 = vpop.permute.xlu0 %2792
        %2796 = vrot.lane.b32.xlu0 %v2487, 32
        %v2797 = vpop.permute.xlu0 %2796
        %2800 = vrot.lane.b32.xlu0 %v2488, 36
        %v2801 = vpop.permute.xlu0 %2800
        %2804 = vrot.lane.b32.xlu0 %v2489, 40
        %v2805 = vpop.permute.xlu0 %2804
        %2808 = vrot.lane.b32.xlu0 %v2490, 44
        %v2809 = vpop.permute.xlu0 %2808
        %2812 = vrot.lane.b32.xlu0 %v2491, 48
        %v2813 = vpop.permute.xlu0 %2812
        %2816 = vrot.lane.b32.xlu0 %v2492, 52
        %v2817 = vpop.permute.xlu0 %2816
        %2820 = vrot.lane.b32.xlu0 %v2493, 56
        %v2821 = vpop.permute.xlu0 %2820
        %2824 = vrot.lane.b32.xlu0 %v2494, 60
        %v2825 = vpop.permute.xlu0 %2824
        %2828 = vrot.lane.b32.xlu0 %v2623, 64
        %v2829 = vpop.permute.xlu0 %2828
        %2832 = vrot.lane.b32.xlu0 %v2624, 68
        %v2833 = vpop.permute.xlu0 %2832
        %2836 = vrot.lane.b32.xlu0 %v2625, 72
        %v2837 = vpop.permute.xlu0 %2836
        %2840 = vrot.lane.b32.xlu0 %v2626, 76
        %v2841 = vpop.permute.xlu0 %2840
        %2844 = vrot.lane.b32.xlu0 %v2627, 80
        %v2845 = vpop.permute.xlu0 %2844
        %2848 = vrot.lane.b32.xlu0 %v2628, 84
        %v2849 = vpop.permute.xlu0 %2848
        %2852 = vrot.lane.b32.xlu0 %v2629, 88
        %v2853 = vpop.permute.xlu0 %2852
        %2856 = vrot.lane.b32.xlu0 %v2630, 92
        %v2857 = vpop.permute.xlu0 %2856
        %2860 = vrot.lane.b32.xlu0 %v2759, 96
        %v2861 = vpop.permute.xlu0 %2860
        %2864 = vrot.lane.b32.xlu0 %v2760, 100
        %v2865 = vpop.permute.xlu0 %2864
        %2868 = vrot.lane.b32.xlu0 %v2761, 104
        %v2869 = vpop.permute.xlu0 %2868
        %2872 = vrot.lane.b32.xlu0 %v2762, 108
        %v2873 = vpop.permute.xlu0 %2872
        %2876 = vrot.lane.b32.xlu0 %v2763, 112
        %v2877 = vpop.permute.xlu0 %2876
        %2880 = vrot.lane.b32.xlu0 %v2764, 116
        %v2881 = vpop.permute.xlu0 %2880
        %2884 = vrot.lane.b32.xlu0 %v2765, 120
        %v2885 = vpop.permute.xlu0 %2884
        %2888 = vrot.lane.b32.xlu0 %v2766, 124
        %v2889 = vpop.permute.xlu0 %2888
        %vm2891 = vcmask 31744
        %v2892 = vsel %vm2891, %v2351, %v2769
        %vm2893 = vcmask 64512
        %v2894 = vsel %vm2893, %v2892, %v2773
        %vm2895 = vcmask 97280
        %v2896 = vsel %vm2895, %v2894, %v2777
        %vm2897 = vcmask 130048
        %v2898 = vsel %vm2897, %v2896, %v2781
        %vm2899 = vcmask 162816
        %v2900 = vsel %vm2899, %v2898, %v2785
        %vm2901 = vcmask 195584
        %v2902 = vsel %vm2901, %v2900, %v2789
        %vm2903 = vcmask 228352
        %v2904 = vsel %vm2903, %v2902, %v2793
        %vm2905 = vcmask 261120
        %v2906 = vsel %vm2905, %v2904, %v2797
        %vm2907 = vcmask 293888
        %v2908 = vsel %vm2907, %v2906, %v2801
        %vm2909 = vcmask 326656
        %v2910 = vsel %vm2909, %v2908, %v2805
        %vm2911 = vcmask 359424
        %v2912 = vsel %vm2911, %v2910, %v2809
        %vm2913 = vcmask 392192
        %v2914 = vsel %vm2913, %v2912, %v2813
        %vm2915 = vcmask 424960
        %v2916 = vsel %vm2915, %v2914, %v2817
        %vm2917 = vcmask 457728
        %v2918 = vsel %vm2917, %v2916, %v2821
        %vm2919 = vcmask 490496
        %v2920 = vsel %vm2919, %v2918, %v2825
        %vm2921 = vcmask 523264
        %v2922 = vsel %vm2921, %v2920, %v2829
        %vm2923 = vcmask 556032
        %v2924 = vsel %vm2923, %v2922, %v2833
        %vm2925 = vcmask 588800
        %v2926 = vsel %vm2925, %v2924, %v2837
        %vm2927 = vcmask 621568
        %v2928 = vsel %vm2927, %v2926, %v2841
        %vm2929 = vcmask 654336
        %v2930 = vsel %vm2929, %v2928, %v2845
        %vm2931 = vcmask 687104
        %v2932 = vsel %vm2931, %v2930, %v2849
        %vm2933 = vcmask 719872
        %v2934 = vsel %vm2933, %v2932, %v2853
        %vm2935 = vcmask 752640
        %v2936 = vsel %vm2935, %v2934, %v2857
        %vm2937 = vcmask 785408
        %v2938 = vsel %vm2937, %v2936, %v2861
        %vm2939 = vcmask 818176
        %v2940 = vsel %vm2939, %v2938, %v2865
        %vm2941 = vcmask 850944
        %v2942 = vsel %vm2941, %v2940, %v2869
        %vm2943 = vcmask 883712
        %v2944 = vsel %vm2943, %v2942, %v2873
        %vm2945 = vcmask 916480
        %v2946 = vsel %vm2945, %v2944, %v2877
        %vm2947 = vcmask 949248
        %v2948 = vsel %vm2947, %v2946, %v2881
        %vm2949 = vcmask 982016
        %v2950 = vsel %vm2949, %v2948, %v2885
        %vm2951 = vcmask 1014784
        %v2952 = vsel %vm2951, %v2950, %v2889
        %2953 = vst [vmem:[%s150] sm:$0xff] %v2952
        %s2954 = sand.u32 %s68, 1
        %s2955 = scalar_lea.sflag [#allocation4], %s2954
        %s2956 = sand.u32 %s68, 1
        %s2957 = smul.addr %s2956, 8
        %s2958 = scalar_lea.vmem [#allocation5], %s2957
        // Predicated region
        $region29: #{tpu_custom_call.1} parent=23 // pred_check
          %p2959 = pneg %p78
        $region30: #{tpu_custom_call.1} parent=23 // pred_check_branch
          %2961 = sbr.rel (%p2959) target = $region32
        $region31: #{tpu_custom_call.1} parent=23 // pred_region
          %s2963 = ssub.s32 128, 128
          %2964 = vsyncadd %s2955, %s2963
          %s2965 = sadd.s32 %s23, %s22
          %s2966 = smul.addr %s2965, 128
          %s2967 = scalar_lea.hbm %s1, %s2966
          %s2969 = sshll.u32 %s2958, 4
          %s2970 = int_to_ptr.vmem [resolvable:$true] %s2969
          %2972 = dma.vmem_to_hbm [thread:$0]  %s2970, 128, %s2967, %s2955
        $region32: #{tpu_custom_call.1} parent=23 // pred_fallthru
          _
      $region24: #{tpu_custom_call.1} parent=5 // pred_fallthru
        _
      %p2973 = scmp.le.s32.totalorder 2, %s13
      // Predicated region
      $region33: #{tpu_custom_call.1} parent=5 // pred_check
        %p2974 = pneg %p2973
      $region34: #{tpu_custom_call.1} parent=5 // pred_check_branch
        %2976 = sbr.rel (%p2974) target = $region36
      $region35: #{tpu_custom_call.1} parent=5 // pred_region
        %s2977 = ssub.s32 %s13, 2
        // Predicated region
        $region37: #{tpu_custom_call.1} parent=35 // pred_check
          %p2978 = pneg %p84
        $region38: #{tpu_custom_call.1} parent=35 // pred_check_branch
          %2980 = sbr.rel (%p2978) target = $region40
        $region39: #{tpu_custom_call.1} parent=35 // pred_region
          %s2981 = sand.u32 %s69, 1
          %s2982 = scalar_lea.sflag [#allocation4], %s2981
          %s2983 = sand.u32 %s69, 1
          %s2984 = smul.addr %s2983, 8
          %s2985 = scalar_lea.vmem [#allocation5], %s2984
          %2986 = dma.done %s2982, 128
        $region40: #{tpu_custom_call.1} parent=35 // pred_fallthru
          _
      $region36: #{tpu_custom_call.1} parent=5 // pred_fallthru
        _
    $region6: #{tpu_custom_call.1} parent=1 // loop_footer
      %s17 = sadd.s32 1, %s13
    $region7: #{tpu_custom_call.1} parent=1 // loop_footer_branch
      %12 = sbr.rel target = $region3
    $region8: #{tpu_custom_call.1} parent=1 // loop_exit
      _
    %2987 = vsyncpa [#allocation3], 1
    %s2988 = scalar_lea.sflag [#allocation3], 1
    %2989 = vsyncpa %s2988, 1
    %2990 = vsyncpa [#allocation4], 1
    %s2991 = scalar_lea.sflag [#allocation4], 1
    %2992 = vsyncpa %s2991, 1

</llo_original>
